<compile_context>
chip_gen: v7x
topology: tpu7x:2x2x1
jax: 0.10.0
libtpu: 0.0.40
codegen_flags: <defaults>
</compile_context>

<pallas_src>
import functools

import jax
import jax.numpy as jnp
from jax.experimental import pallas as pl
from jax.experimental.pallas import tpu as pltpu


def _leaky_relu(v, slope=0.2):
    return jnp.where(v > 0, v, slope * v)


def _round_up(n, m=128):
    return ((n + m - 1) // m) * m


def generator_kernel(x_ref,
                     w1_ref, b1_ref,
                     w2_ref, b2_ref,
                     w3_ref, b3_ref,
                     w4_ref, b4_ref,
                     out_ref):
    """Fused 4-layer MLP: (linear -> leaky_relu) x3 -> linear -> tanh.

    x_ref and w*_ref are bf16 (MXU-native); b*_ref and out_ref are f32.
    All accumulation is f32 via preferred_element_type.
    """
    x = x_ref[...]                                          # bf16 (tb, in_p)

    h = jnp.dot(x, w1_ref[...], preferred_element_type=jnp.float32)
    h = _leaky_relu(h + b1_ref[...])
    # dropout(0.3) in eval mode == identity

    h = jnp.dot(h.astype(jnp.bfloat16), w2_ref[...],
                preferred_element_type=jnp.float32)
    h = _leaky_relu(h + b2_ref[...])

    h = jnp.dot(h.astype(jnp.bfloat16), w3_ref[...],
                preferred_element_type=jnp.float32)
    h = _leaky_relu(h + b3_ref[...])

    h = jnp.dot(h.astype(jnp.bfloat16), w4_ref[...],
                preferred_element_type=jnp.float32)
    out_ref[...] = jnp.tanh(h + b4_ref[...])                # f32, lane-dense


@functools.partial(jax.jit, static_argnames=("block_b",))
def generator_forward(x, params, block_b=256):
    """x: (B, input_size) f32. params: dict of (in,out) weights + (1,out) biases."""
    assert block_b % 8 == 0, "block_b must be a multiple of 8"
    B, in_size = x.shape
    out_size = params["w4"].shape[1]

    # --- pad feature dims to multiples of 128 (zero padding is exact:
    #     zero input cols x zero weight rows contribute 0; padded output
    #     lanes are sliced off below) and cast matmul operands to bf16. ---
    dims = [in_size,
            params["w1"].shape[1],
            params["w2"].shape[1],
            params["w3"].shape[1],
            out_size]
    dims_p = [_round_up(d) for d in dims]

    def pad_w(w, rp, cp):
        return jnp.pad(w, ((0, rp - w.shape[0]), (0, cp - w.shape[1]))
                       ).astype(jnp.bfloat16)

    def pad_b(b, cp):
        return jnp.pad(b, ((0, 0), (0, cp - b.shape[1]))).astype(jnp.float32)

    ws = [pad_w(params[f"w{i}"], dims_p[i - 1], dims_p[i]) for i in range(1, 5)]
    bs = [pad_b(params[f"b{i}"], dims_p[i]) for i in range(1, 5)]

    # --- pad batch to a multiple of the tile size ---
    Bp = _round_up(B, block_b)
    xp = jnp.pad(x, ((0, Bp - B), (0, dims_p[0] - in_size))).astype(jnp.bfloat16)

    grid = (pl.cdiv(Bp, block_b),)
    in_p, h1, h2, h3, out_p = dims_p

    def full_spec(arr):
        # weights / biases resident across the whole grid
        return pl.BlockSpec(arr.shape, lambda i: (0, 0))

    flops = 2 * Bp * (in_p * h1 + h1 * h2 + h2 * h3 + h3 * out_p)
    bytes_accessed = (xp.size * 2
                      + sum(w.size * 2 for w in ws)
                      + sum(b.size * 4 for b in bs)
                      + Bp * out_p * 4)
    cost = pl.CostEstimate(flops=flops,
                           transcendentals=Bp * out_p,
                           bytes_accessed=bytes_accessed)

    out_padded = pl.pallas_call(
        generator_kernel,
        out_shape=jax.ShapeDtypeStruct((Bp, out_p), jnp.float32),
        grid_spec=pltpu.PrefetchScalarGridSpec(
            num_scalar_prefetch=0,
            grid=grid,
            in_specs=[
                pl.BlockSpec((block_b, in_p), lambda i: (i, 0)),
                full_spec(ws[0]), full_spec(bs[0]),
                full_spec(ws[1]), full_spec(bs[1]),
                full_spec(ws[2]), full_spec(bs[2]),
                full_spec(ws[3]), full_spec(bs[3]),
            ],
            out_specs=pl.BlockSpec((block_b, out_p), lambda i: (i, 0)),
        ),
        compiler_params=pltpu.CompilerParams(
            dimension_semantics=("parallel",)),
        cost_estimate=cost,
    )(xp,
      ws[0], bs[0],
      ws[1], bs[1],
      ws[2], bs[2],
      ws[3], bs[3])

    return out_padded[:B, :out_size]


def init_generator_params(key, input_size, hidden_dim, output_size):
    """Deterministic init mimicking nn.Linear default: U(-1/sqrt(fan_in), ...)."""
    dims = [(input_size, hidden_dim),
            (hidden_dim, 2 * hidden_dim),
            (2 * hidden_dim, 4 * hidden_dim),
            (4 * hidden_dim, output_size)]
    params = {}
    for idx, (fan_in, fan_out) in enumerate(dims, start=1):
        key, kw, kb = jax.random.split(key, 3)
        bound = 1.0 / jnp.sqrt(float(fan_in))
        params[f"w{idx}"] = jax.random.uniform(
            kw, (fan_in, fan_out), jnp.float32, -bound, bound)
        params[f"b{idx}"] = jax.random.uniform(
            kb, (1, fan_out), jnp.float32, -bound, bound)
    return params


def generator_ref(x, params):
    """Pure-JAX f32 reference for correctness check."""
    h = _leaky_relu(x @ params["w1"] + params["b1"])
    h = _leaky_relu(h @ params["w2"] + params["b2"])
    h = _leaky_relu(h @ params["w3"] + params["b3"])
    return jnp.tanh(h @ params["w4"] + params["b4"])


if __name__ == "__main__":
    # Generator(z) -> image: noise dim 100, hidden 32, output 784 (28x28).
    batch = 256
    input_size = 100
    hidden_dim = 32
    output_size = 784

    key = jax.random.PRNGKey(0)
    key, kx = jax.random.split(key)
    x = jax.random.normal(kx, (batch, input_size), jnp.float32)
    params = init_generator_params(key, input_size, hidden_dim, output_size)

    # block_b=128 -> grid of 2 tiles so both v7x TensorCores get work.
    out = generator_forward(x, params, block_b=128)
    out = jax.block_until_ready(out)

    ref = generator_ref(x, params)
    assert out.shape == (batch, output_size)
    # bf16 matmul operands (f32 accumulation) -> loosened tolerance vs f32 ref.
    assert jnp.allclose(out, ref, atol=3e-2, rtol=3e-2), "mismatch vs reference"

    print("KERNEL_OK")
</pallas_src>

<mosaic_0001>
module attributes {stable_mosaic.version = 11 : i64} {
  func.func @generator_kernel(%arg0: i32, %arg1: memref<128x128xbf16, #tpu.memory_space<vmem>>, %arg2: memref<128x128xbf16, #tpu.memory_space<vmem>>, %arg3: memref<1x128xf32, #tpu.memory_space<vmem>>, %arg4: memref<128x128xbf16, #tpu.memory_space<vmem>>, %arg5: memref<1x128xf32, #tpu.memory_space<vmem>>, %arg6: memref<128x128xbf16, #tpu.memory_space<vmem>>, %arg7: memref<1x128xf32, #tpu.memory_space<vmem>>, %arg8: memref<128x896xbf16, #tpu.memory_space<vmem>>, %arg9: memref<1x896xf32, #tpu.memory_space<vmem>>, %arg10: memref<128x896xf32, #tpu.memory_space<vmem>>) attributes {dimension_semantics = [#tpu.dimension_semantics<parallel>], iteration_bounds = array<i64: 2>, scalar_prefetch = 0 : i64, scratch_operands = 0 : i64, tpu.core_type = #tpu.core_type<tc>, window_params = [{transform_indices = @transform_0, window_bounds = array<i64: 128, 128>}, {pipeline_mode = #tpu.pipeline_mode<synchronous>, transform_indices = @transform_1, window_bounds = array<i64: 128, 128>}, {pipeline_mode = #tpu.pipeline_mode<synchronous>, transform_indices = @transform_2, window_bounds = array<i64: 1, 128>}, {pipeline_mode = #tpu.pipeline_mode<synchronous>, transform_indices = @transform_3, window_bounds = array<i64: 128, 128>}, {pipeline_mode = #tpu.pipeline_mode<synchronous>, transform_indices = @transform_4, window_bounds = array<i64: 1, 128>}, {pipeline_mode = #tpu.pipeline_mode<synchronous>, transform_indices = @transform_5, window_bounds = array<i64: 128, 128>}, {pipeline_mode = #tpu.pipeline_mode<synchronous>, transform_indices = @transform_6, window_bounds = array<i64: 1, 128>}, {pipeline_mode = #tpu.pipeline_mode<synchronous>, transform_indices = @transform_7, window_bounds = array<i64: 128, 896>}, {pipeline_mode = #tpu.pipeline_mode<synchronous>, transform_indices = @transform_8, window_bounds = array<i64: 1, 896>}, {transform_indices = @transform_9, window_bounds = array<i64: 128, 896>}]} {
    %c0 = arith.constant 0 : index
    %c0_0 = arith.constant 0 : index
    %0 = vector.load %arg1[%c0, %c0_0] : memref<128x128xbf16, #tpu.memory_space<vmem>>, vector<128x128xbf16>
    %c0_1 = arith.constant 0 : index
    %c0_2 = arith.constant 0 : index
    %1 = vector.load %arg2[%c0_1, %c0_2] : memref<128x128xbf16, #tpu.memory_space<vmem>>, vector<128x128xbf16>
    %cst = arith.constant dense<0.000000e+00> : vector<128x128xf32>
    %2 = tpu.matmul %0, %1, %cst {dimension_numbers = #tpu.dot_dimension_numbers<[1], [0], [0], [1], [0, 0, 1, 1], [], []>} : vector<128x128xbf16>, vector<128x128xbf16>, vector<128x128xf32> -> vector<128x128xf32>
    %c0_3 = arith.constant 0 : index
    %c0_4 = arith.constant 0 : index
    %3 = vector.load %arg3[%c0_3, %c0_4] : memref<1x128xf32, #tpu.memory_space<vmem>>, vector<1x128xf32>
    %4 = vector.broadcast %3 : vector<1x128xf32> to vector<128x128xf32>
    %5 = arith.addf %2, %4 : vector<128x128xf32>
    %cst_5 = arith.constant 0.000000e+00 : f32
    %6 = vector.broadcast %cst_5 : f32 to vector<128x128xf32>
    %7 = arith.cmpf ogt, %5, %6 : vector<128x128xf32>
    %cst_6 = arith.constant 2.000000e-01 : f32
    %8 = vector.broadcast %cst_6 : f32 to vector<128x128xf32>
    %9 = arith.mulf %8, %5 : vector<128x128xf32>
    %10 = arith.select %7, %5, %9 : vector<128x128xi1>, vector<128x128xf32>
    %11 = arith.truncf %10 : vector<128x128xf32> to vector<128x128xbf16>
    %c0_7 = arith.constant 0 : index
    %c0_8 = arith.constant 0 : index
    %12 = vector.load %arg4[%c0_7, %c0_8] : memref<128x128xbf16, #tpu.memory_space<vmem>>, vector<128x128xbf16>
    %cst_9 = arith.constant dense<0.000000e+00> : vector<128x128xf32>
    %13 = tpu.matmul %11, %12, %cst_9 {dimension_numbers = #tpu.dot_dimension_numbers<[1], [0], [0], [1], [0, 0, 1, 1], [], []>} : vector<128x128xbf16>, vector<128x128xbf16>, vector<128x128xf32> -> vector<128x128xf32>
    %c0_10 = arith.constant 0 : index
    %c0_11 = arith.constant 0 : index
    %14 = vector.load %arg5[%c0_10, %c0_11] : memref<1x128xf32, #tpu.memory_space<vmem>>, vector<1x128xf32>
    %15 = vector.broadcast %14 : vector<1x128xf32> to vector<128x128xf32>
    %16 = arith.addf %13, %15 : vector<128x128xf32>
    %cst_12 = arith.constant 0.000000e+00 : f32
    %17 = vector.broadcast %cst_12 : f32 to vector<128x128xf32>
    %18 = arith.cmpf ogt, %16, %17 : vector<128x128xf32>
    %cst_13 = arith.constant 2.000000e-01 : f32
    %19 = vector.broadcast %cst_13 : f32 to vector<128x128xf32>
    %20 = arith.mulf %19, %16 : vector<128x128xf32>
    %21 = arith.select %18, %16, %20 : vector<128x128xi1>, vector<128x128xf32>
    %22 = arith.truncf %21 : vector<128x128xf32> to vector<128x128xbf16>
    %c0_14 = arith.constant 0 : index
    %c0_15 = arith.constant 0 : index
    %23 = vector.load %arg6[%c0_14, %c0_15] : memref<128x128xbf16, #tpu.memory_space<vmem>>, vector<128x128xbf16>
    %cst_16 = arith.constant dense<0.000000e+00> : vector<128x128xf32>
    %24 = tpu.matmul %22, %23, %cst_16 {dimension_numbers = #tpu.dot_dimension_numbers<[1], [0], [0], [1], [0, 0, 1, 1], [], []>} : vector<128x128xbf16>, vector<128x128xbf16>, vector<128x128xf32> -> vector<128x128xf32>
    %c0_17 = arith.constant 0 : index
    %c0_18 = arith.constant 0 : index
    %25 = vector.load %arg7[%c0_17, %c0_18] : memref<1x128xf32, #tpu.memory_space<vmem>>, vector<1x128xf32>
    %26 = vector.broadcast %25 : vector<1x128xf32> to vector<128x128xf32>
    %27 = arith.addf %24, %26 : vector<128x128xf32>
    %cst_19 = arith.constant 0.000000e+00 : f32
    %28 = vector.broadcast %cst_19 : f32 to vector<128x128xf32>
    %29 = arith.cmpf ogt, %27, %28 : vector<128x128xf32>
    %cst_20 = arith.constant 2.000000e-01 : f32
    %30 = vector.broadcast %cst_20 : f32 to vector<128x128xf32>
    %31 = arith.mulf %30, %27 : vector<128x128xf32>
    %32 = arith.select %29, %27, %31 : vector<128x128xi1>, vector<128x128xf32>
    %33 = arith.truncf %32 : vector<128x128xf32> to vector<128x128xbf16>
    %c0_21 = arith.constant 0 : index
    %c0_22 = arith.constant 0 : index
    %34 = vector.load %arg8[%c0_21, %c0_22] : memref<128x896xbf16, #tpu.memory_space<vmem>>, vector<128x896xbf16>
    %cst_23 = arith.constant dense<0.000000e+00> : vector<128x896xf32>
    %35 = tpu.matmul %33, %34, %cst_23 {dimension_numbers = #tpu.dot_dimension_numbers<[1], [0], [0], [1], [0, 0, 1, 1], [], []>} : vector<128x128xbf16>, vector<128x896xbf16>, vector<128x896xf32> -> vector<128x896xf32>
    %c0_24 = arith.constant 0 : index
    %c0_25 = arith.constant 0 : index
    %36 = vector.load %arg9[%c0_24, %c0_25] : memref<1x896xf32, #tpu.memory_space<vmem>>, vector<1x896xf32>
    %37 = vector.broadcast %36 : vector<1x896xf32> to vector<128x896xf32>
    %38 = arith.addf %35, %37 : vector<128x896xf32>
    %39 = math.tanh %38 : vector<128x896xf32>
    %c0_26 = arith.constant 0 : index
    %c0_27 = arith.constant 0 : index
    %40 = vector.load %arg10[%c0_26, %c0_27] : memref<128x896xf32, #tpu.memory_space<vmem>>, vector<128x896xf32>
    tpu.vector_store %arg10[%c0_26, %c0_27], %39 {strides = array<i32>} : memref<128x896xf32, #tpu.memory_space<vmem>>, vector<128x896xf32>,
    return
  }
  func.func @transform_0(%arg0: i32) -> (i32, i32) {
    %c0_i32 = arith.constant 0 : i32
    %c0_i32_0 = arith.constant 0 : i32
    return %arg0, %c0_i32 : i32, i32
  }
  func.func @transform_1(%arg0: i32) -> (i32, i32) {
    %c0_i32 = arith.constant 0 : i32
    %c0_i32_0 = arith.constant 0 : i32
    %c0_i32_1 = arith.constant 0 : i32
    return %c0_i32, %c0_i32_0 : i32, i32
  }
  func.func @transform_2(%arg0: i32) -> (i32, i32) {
    %c0_i32 = arith.constant 0 : i32
    %c0_i32_0 = arith.constant 0 : i32
    %c0_i32_1 = arith.constant 0 : i32
    return %c0_i32, %c0_i32_0 : i32, i32
  }
  func.func @transform_3(%arg0: i32) -> (i32, i32) {
    %c0_i32 = arith.constant 0 : i32
    %c0_i32_0 = arith.constant 0 : i32
    %c0_i32_1 = arith.constant 0 : i32
    return %c0_i32, %c0_i32_0 : i32, i32
  }
  func.func @transform_4(%arg0: i32) -> (i32, i32) {
    %c0_i32 = arith.constant 0 : i32
    %c0_i32_0 = arith.constant 0 : i32
    %c0_i32_1 = arith.constant 0 : i32
    return %c0_i32, %c0_i32_0 : i32, i32
  }
  func.func @transform_5(%arg0: i32) -> (i32, i32) {
    %c0_i32 = arith.constant 0 : i32
    %c0_i32_0 = arith.constant 0 : i32
    %c0_i32_1 = arith.constant 0 : i32
    return %c0_i32, %c0_i32_0 : i32, i32
  }
  func.func @transform_6(%arg0: i32) -> (i32, i32) {
    %c0_i32 = arith.constant 0 : i32
    %c0_i32_0 = arith.constant 0 : i32
    %c0_i32_1 = arith.constant 0 : i32
    return %c0_i32, %c0_i32_0 : i32, i32
  }
  func.func @transform_7(%arg0: i32) -> (i32, i32) {
    %c0_i32 = arith.constant 0 : i32
    %c0_i32_0 = arith.constant 0 : i32
    %c0_i32_1 = arith.constant 0 : i32
    return %c0_i32, %c0_i32_0 : i32, i32
  }
  func.func @transform_8(%arg0: i32) -> (i32, i32) {
    %c0_i32 = arith.constant 0 : i32
    %c0_i32_0 = arith.constant 0 : i32
    %c0_i32_1 = arith.constant 0 : i32
    return %c0_i32, %c0_i32_0 : i32, i32
  }
  func.func @transform_9(%arg0: i32) -> (i32, i32) {
    %c0_i32 = arith.constant 0 : i32
    %c0_i32_0 = arith.constant 0 : i32
    return %arg0, %c0_i32 : i32, i32
  }
}

</mosaic_0001>

<llo_original>
// kernel: generator_forward.1
$region0: #{generator_forward.1}
  #allocation0 [shape = 'u32[]', space=smem, size = 0x4, offset = 0x4, fixed_abs, tag = 'smem constant byte address 0x4 - core index']
  #allocation1 [shape = 'u32[144,128]{1,0:T(1,128)}', space=vmem, size = 0x12000, scoped, tag = 'internal scratch']
  %s0 = inlined_call_operand.vmem [shape: bf16[256,128], index: 0, kind: input, shape index: {}]
  %s1 = inlined_call_operand.vmem [shape: bf16[128,128], index: 1, kind: input, shape index: {}]
  %s2 = inlined_call_operand.vmem [shape: f32[1,128], index: 2, kind: input, shape index: {}]
  %s3 = inlined_call_operand.vmem [shape: bf16[128,128], index: 3, kind: input, shape index: {}]
  %s4 = inlined_call_operand.vmem [shape: f32[1,128], index: 4, kind: input, shape index: {}]
  %s5 = inlined_call_operand.vmem [shape: bf16[128,128], index: 5, kind: input, shape index: {}]
  %s6 = inlined_call_operand.vmem [shape: f32[1,128], index: 6, kind: input, shape index: {}]
  %s7 = inlined_call_operand.vmem [shape: bf16[128,896], index: 7, kind: input, shape index: {}]
  %s8 = inlined_call_operand.vmem [shape: f32[1,896], index: 8, kind: input, shape index: {}]
  %s9 = inlined_call_operand.vmem [shape: f32[256,896], index: 9, kind: output, shape index: {}]
  %s10 = sld [smem:[#allocation0]]
  $region69: #{generator_forward.1} parent=0
    _
  %s12 = ssub.s32 1, %s10
  %s13 = scalar_select 0, %s12, %s10
  loop: start=0, step=1, limit=4
  $region2: #{generator_forward.1} parent=0 // loop_pre_header
    _
  $region3: #{generator_forward.1} parent=0 // loop_header
    %s15 = sphi 0, %s19
    %p16 = scmp.ge.s32.totalorder %s15, 4
    %s25 = sphi 0, %s27
    %s28 = sphi 0, %s25
    %s29 = sphi 0, %s28
    %s45 = sphi 0, %s29
    %s49 = sphi 0, %s49
    %s51 = sphi 0, %s49
    %s52 = sphi 0, %s51
    %s66 = sphi 0, %s52
    %s70 = sphi 0, %s70
    %s72 = sphi 0, %s70
    %s73 = sphi 0, %s72
    %s87 = sphi 0, %s73
    %s91 = sphi 0, %s91
    %s93 = sphi 0, %s91
    %s94 = sphi 0, %s93
    %s108 = sphi 0, %s94
    %s112 = sphi 0, %s112
    %s114 = sphi 0, %s112
    %s115 = sphi 0, %s114
    %s129 = sphi 0, %s115
    %s133 = sphi 0, %s133
    %s135 = sphi 0, %s133
    %s136 = sphi 0, %s135
    %s150 = sphi 0, %s136
    %s154 = sphi 0, %s154
    %s156 = sphi 0, %s154
    %s157 = sphi 0, %s156
    %s171 = sphi 0, %s157
    %s175 = sphi 0, %s175
    %s177 = sphi 0, %s175
    %s178 = sphi 0, %s177
    %s192 = sphi 0, %s178
    %s196 = sphi 0, %s196
    %s198 = sphi 0, %s196
    %s199 = sphi 0, %s198
    %s213 = sphi 0, %s199
    %s219 = sphi 0, %s221
    %s222 = sphi 0, %s219
    %s223 = sphi 0, %s222
    %s239 = sphi 0, %s223
  $region4: #{generator_forward.1} parent=0 // loop_header_branch
    %18 = sbr.rel (%p16) target = $region8
  $region5: #{generator_forward.1} parent=0 // loop_body
    %s20 = ssub.s32 %s15, 1
    %s21 = ssub.s32 %s15, 2
    %s22 = sadd.s32 %s15, 1
    %s23 = ssub.s32 %s15, %s22
    %p24 = scmp.eq.s32.totalorder %s23, 0
    %s26 = sadd.s32 %s25, 1
    %s27 = scalar_select %p24, %s25, %s26
    %p30 = pneg %p24
    %p31 = scmp.eq.s32.totalorder %s15, 1
    %p32 = por %p30, %p31
    %p33 = scmp.ne.s32.totalorder %s25, %s28
    %p34 = scmp.eq.s32.totalorder %s15, 0
    %p35 = por %p33, %p34
    %p36 = scmp.ne.s32.totalorder %s25, %s28
    %p37 = scmp.eq.s32.totalorder %s20, 1
    %p38 = por %p36, %p37
    %p39 = scmp.ne.s32.totalorder %s28, %s29
    %p40 = scmp.eq.s32.totalorder %s20, 0
    %p41 = por %p39, %p40
    %p42 = scmp.ne.s32.totalorder %s28, %s29
    %p43 = scmp.eq.s32.totalorder %s21, 1
    %p44 = por %p42, %p43
    %p46 = scmp.ne.s32.totalorder %s29, %s45
    %p47 = scmp.eq.s32.totalorder %s21, 0
    %p48 = por %p46, %p47
    %s50 = sadd.s32 %s49, 1
    %p53 = scmp.eq.s32.totalorder %s15, 1
    %p54 = scmp.ne.s32.totalorder %s49, %s51
    %p55 = scmp.eq.s32.totalorder %s15, 0
    %p56 = por %p54, %p55
    %p57 = scmp.ne.s32.totalorder %s49, %s51
    %p58 = scmp.eq.s32.totalorder %s20, 1
    %p59 = por %p57, %p58
    %p60 = scmp.ne.s32.totalorder %s51, %s52
    %p61 = scmp.eq.s32.totalorder %s20, 0
    %p62 = por %p60, %p61
    %p63 = scmp.ne.s32.totalorder %s51, %s52
    %p64 = scmp.eq.s32.totalorder %s21, 1
    %p65 = por %p63, %p64
    %p67 = scmp.ne.s32.totalorder %s52, %s66
    %p68 = scmp.eq.s32.totalorder %s21, 0
    %p69 = por %p67, %p68
    %s71 = sadd.s32 %s70, 1
    %p74 = scmp.eq.s32.totalorder %s15, 1
    %p75 = scmp.ne.s32.totalorder %s70, %s72
    %p76 = scmp.eq.s32.totalorder %s15, 0
    %p77 = por %p75, %p76
    %p78 = scmp.ne.s32.totalorder %s70, %s72
    %p79 = scmp.eq.s32.totalorder %s20, 1
    %p80 = por %p78, %p79
    %p81 = scmp.ne.s32.totalorder %s72, %s73
    %p82 = scmp.eq.s32.totalorder %s20, 0
    %p83 = por %p81, %p82
    %p84 = scmp.ne.s32.totalorder %s72, %s73
    %p85 = scmp.eq.s32.totalorder %s21, 1
    %p86 = por %p84, %p85
    %p88 = scmp.ne.s32.totalorder %s73, %s87
    %p89 = scmp.eq.s32.totalorder %s21, 0
    %p90 = por %p88, %p89
    %s92 = sadd.s32 %s91, 1
    %p95 = scmp.eq.s32.totalorder %s15, 1
    %p96 = scmp.ne.s32.totalorder %s91, %s93
    %p97 = scmp.eq.s32.totalorder %s15, 0
    %p98 = por %p96, %p97
    %p99 = scmp.ne.s32.totalorder %s91, %s93
    %p100 = scmp.eq.s32.totalorder %s20, 1
    %p101 = por %p99, %p100
    %p102 = scmp.ne.s32.totalorder %s93, %s94
    %p103 = scmp.eq.s32.totalorder %s20, 0
    %p104 = por %p102, %p103
    %p105 = scmp.ne.s32.totalorder %s93, %s94
    %p106 = scmp.eq.s32.totalorder %s21, 1
    %p107 = por %p105, %p106
    %p109 = scmp.ne.s32.totalorder %s94, %s108
    %p110 = scmp.eq.s32.totalorder %s21, 0
    %p111 = por %p109, %p110
    %s113 = sadd.s32 %s112, 1
    %p116 = scmp.eq.s32.totalorder %s15, 1
    %p117 = scmp.ne.s32.totalorder %s112, %s114
    %p118 = scmp.eq.s32.totalorder %s15, 0
    %p119 = por %p117, %p118
    %p120 = scmp.ne.s32.totalorder %s112, %s114
    %p121 = scmp.eq.s32.totalorder %s20, 1
    %p122 = por %p120, %p121
    %p123 = scmp.ne.s32.totalorder %s114, %s115
    %p124 = scmp.eq.s32.totalorder %s20, 0
    %p125 = por %p123, %p124
    %p126 = scmp.ne.s32.totalorder %s114, %s115
    %p127 = scmp.eq.s32.totalorder %s21, 1
    %p128 = por %p126, %p127
    %p130 = scmp.ne.s32.totalorder %s115, %s129
    %p131 = scmp.eq.s32.totalorder %s21, 0
    %p132 = por %p130, %p131
    %s134 = sadd.s32 %s133, 1
    %p137 = scmp.eq.s32.totalorder %s15, 1
    %p138 = scmp.ne.s32.totalorder %s133, %s135
    %p139 = scmp.eq.s32.totalorder %s15, 0
    %p140 = por %p138, %p139
    %p141 = scmp.ne.s32.totalorder %s133, %s135
    %p142 = scmp.eq.s32.totalorder %s20, 1
    %p143 = por %p141, %p142
    %p144 = scmp.ne.s32.totalorder %s135, %s136
    %p145 = scmp.eq.s32.totalorder %s20, 0
    %p146 = por %p144, %p145
    %p147 = scmp.ne.s32.totalorder %s135, %s136
    %p148 = scmp.eq.s32.totalorder %s21, 1
    %p149 = por %p147, %p148
    %p151 = scmp.ne.s32.totalorder %s136, %s150
    %p152 = scmp.eq.s32.totalorder %s21, 0
    %p153 = por %p151, %p152
    %s155 = sadd.s32 %s154, 1
    %p158 = scmp.eq.s32.totalorder %s15, 1
    %p159 = scmp.ne.s32.totalorder %s154, %s156
    %p160 = scmp.eq.s32.totalorder %s15, 0
    %p161 = por %p159, %p160
    %p162 = scmp.ne.s32.totalorder %s154, %s156
    %p163 = scmp.eq.s32.totalorder %s20, 1
    %p164 = por %p162, %p163
    %p165 = scmp.ne.s32.totalorder %s156, %s157
    %p166 = scmp.eq.s32.totalorder %s20, 0
    %p167 = por %p165, %p166
    %p168 = scmp.ne.s32.totalorder %s156, %s157
    %p169 = scmp.eq.s32.totalorder %s21, 1
    %p170 = por %p168, %p169
    %p172 = scmp.ne.s32.totalorder %s157, %s171
    %p173 = scmp.eq.s32.totalorder %s21, 0
    %p174 = por %p172, %p173
    %s176 = sadd.s32 %s175, 1
    %p179 = scmp.eq.s32.totalorder %s15, 1
    %p180 = scmp.ne.s32.totalorder %s175, %s177
    %p181 = scmp.eq.s32.totalorder %s15, 0
    %p182 = por %p180, %p181
    %p183 = scmp.ne.s32.totalorder %s175, %s177
    %p184 = scmp.eq.s32.totalorder %s20, 1
    %p185 = por %p183, %p184
    %p186 = scmp.ne.s32.totalorder %s177, %s178
    %p187 = scmp.eq.s32.totalorder %s20, 0
    %p188 = por %p186, %p187
    %p189 = scmp.ne.s32.totalorder %s177, %s178
    %p190 = scmp.eq.s32.totalorder %s21, 1
    %p191 = por %p189, %p190
    %p193 = scmp.ne.s32.totalorder %s178, %s192
    %p194 = scmp.eq.s32.totalorder %s21, 0
    %p195 = por %p193, %p194
    %s197 = sadd.s32 %s196, 1
    %p200 = scmp.eq.s32.totalorder %s15, 1
    %p201 = scmp.ne.s32.totalorder %s196, %s198
    %p202 = scmp.eq.s32.totalorder %s15, 0
    %p203 = por %p201, %p202
    %p204 = scmp.ne.s32.totalorder %s196, %s198
    %p205 = scmp.eq.s32.totalorder %s20, 1
    %p206 = por %p204, %p205
    %p207 = scmp.ne.s32.totalorder %s198, %s199
    %p208 = scmp.eq.s32.totalorder %s20, 0
    %p209 = por %p207, %p208
    %p210 = scmp.ne.s32.totalorder %s198, %s199
    %p211 = scmp.eq.s32.totalorder %s21, 1
    %p212 = por %p210, %p211
    %p214 = scmp.ne.s32.totalorder %s199, %s213
    %p215 = scmp.eq.s32.totalorder %s21, 0
    %p216 = por %p214, %p215
    %s217 = ssub.s32 %s15, %s22
    %p218 = scmp.eq.s32.totalorder %s217, 0
    %s220 = sadd.s32 %s219, 1
    %s221 = scalar_select %p218, %s219, %s220
    %p224 = pneg %p218
    %p225 = scmp.eq.s32.totalorder %s15, 1
    %p226 = por %p224, %p225
    %p227 = scmp.ne.s32.totalorder %s219, %s222
    %p228 = scmp.eq.s32.totalorder %s15, 0
    %p229 = por %p227, %p228
    %p230 = scmp.ne.s32.totalorder %s219, %s222
    %p231 = scmp.eq.s32.totalorder %s20, 1
    %p232 = por %p230, %p231
    %p233 = scmp.ne.s32.totalorder %s222, %s223
    %p234 = scmp.eq.s32.totalorder %s20, 0
    %p235 = por %p233, %p234
    %p236 = scmp.ne.s32.totalorder %s222, %s223
    %p237 = scmp.eq.s32.totalorder %s21, 1
    %p238 = por %p236, %p237
    %p240 = scmp.ne.s32.totalorder %s223, %s239
    %p241 = scmp.eq.s32.totalorder %s21, 0
    %p242 = por %p240, %p241
    %p243 = scmp.le.s32.totalorder 1, %s15
    %p244 = scmp.lt.s32.totalorder %s15, 3
    %p245 = pnand %p243, %p244
    %p246 = pneg %p245
    // Predicated region
    $region9: #{generator_forward.1} parent=5 // pred_check
      _
    $region10: #{generator_forward.1} parent=5 // pred_check_branch
      %248 = sbr.rel (%p245) target = $region12
    $region11: #{generator_forward.1} parent=5 // pred_region
      %s249 = ssub.s32 %s15, 1
      // Predicated region
      $region13: #{generator_forward.1} parent=11 // pred_check
        %p250 = pneg %p62
      $region14: #{generator_forward.1} parent=11 // pred_check_branch
        %252 = sbr.rel (%p250) target = $region16
      $region15: #{generator_forward.1} parent=11 // pred_region
        _
      $region16: #{generator_forward.1} parent=11 // pred_fallthru
        _
      // Predicated region
      $region17: #{generator_forward.1} parent=11 // pred_check
        %p253 = pneg %p83
      $region18: #{generator_forward.1} parent=11 // pred_check_branch
        %255 = sbr.rel (%p253) target = $region20
      $region19: #{generator_forward.1} parent=11 // pred_region
        _
      $region20: #{generator_forward.1} parent=11 // pred_fallthru
        _
      // Predicated region
      $region21: #{generator_forward.1} parent=11 // pred_check
        %p256 = pneg %p104
      $region22: #{generator_forward.1} parent=11 // pred_check_branch
        %258 = sbr.rel (%p256) target = $region24
      $region23: #{generator_forward.1} parent=11 // pred_region
        _
      $region24: #{generator_forward.1} parent=11 // pred_fallthru
        _
      // Predicated region
      $region25: #{generator_forward.1} parent=11 // pred_check
        %p259 = pneg %p125
      $region26: #{generator_forward.1} parent=11 // pred_check_branch
        %261 = sbr.rel (%p259) target = $region28
      $region27: #{generator_forward.1} parent=11 // pred_region
        _
      $region28: #{generator_forward.1} parent=11 // pred_fallthru
        _
      // Predicated region
      $region29: #{generator_forward.1} parent=11 // pred_check
        %p262 = pneg %p146
      $region30: #{generator_forward.1} parent=11 // pred_check_branch
        %264 = sbr.rel (%p262) target = $region32
      $region31: #{generator_forward.1} parent=11 // pred_region
        _
      $region32: #{generator_forward.1} parent=11 // pred_fallthru
        _
      // Predicated region
      $region33: #{generator_forward.1} parent=11 // pred_check
        %p265 = pneg %p167
      $region34: #{generator_forward.1} parent=11 // pred_check_branch
        %267 = sbr.rel (%p265) target = $region36
      $region35: #{generator_forward.1} parent=11 // pred_region
        _
      $region36: #{generator_forward.1} parent=11 // pred_fallthru
        _
      // Predicated region
      $region37: #{generator_forward.1} parent=11 // pred_check
        %p268 = pneg %p188
      $region38: #{generator_forward.1} parent=11 // pred_check_branch
        %270 = sbr.rel (%p268) target = $region40
      $region39: #{generator_forward.1} parent=11 // pred_region
        _
      $region40: #{generator_forward.1} parent=11 // pred_fallthru
        _
      // Predicated region
      $region41: #{generator_forward.1} parent=11 // pred_check
        %p271 = pneg %p209
      $region42: #{generator_forward.1} parent=11 // pred_check_branch
        %273 = sbr.rel (%p271) target = $region44
      $region43: #{generator_forward.1} parent=11 // pred_region
        _
      $region44: #{generator_forward.1} parent=11 // pred_fallthru
        _
    $region12: #{generator_forward.1} parent=5 // pred_fallthru
      _
    %p274 = scmp.lt.s32.totalorder %s15, 2
    // Predicated region
    $region45: #{generator_forward.1} parent=5 // pred_check
      %p275 = pneg %p274
    $region46: #{generator_forward.1} parent=5 // pred_check_branch
      %277 = sbr.rel (%p275) target = $region48
    $region47: #{generator_forward.1} parent=5 // pred_region
      // Predicated region
      $region49: #{generator_forward.1} parent=47 // pred_check
        %p278 = pneg %p35
      $region50: #{generator_forward.1} parent=47 // pred_check_branch
        %280 = sbr.rel (%p278) target = $region52
      $region51: #{generator_forward.1} parent=47 // pred_region
        %s281 = smul.u32 16, %s15
        %p282 = scmp.lt.s32.totalorder %s281, 31
        %s283 = scalar_select %p282, %s281, 31
        %s284 = smul.addr %s283, 4
        %s285 = scalar_lea.vmem %s0, %s284
        %s286 = smul.u32 16, %s15
      $region52: #{generator_forward.1} parent=47 // pred_fallthru
        _
    $region48: #{generator_forward.1} parent=5 // pred_fallthru
      _
    %p287 = scmp.le.s32.totalorder 1, %s15
    %p288 = scmp.lt.s32.totalorder %s15, 3
    %p289 = pnand %p287, %p288
    %p290 = pneg %p289
    // Predicated region
    $region53: #{generator_forward.1} parent=5 // pred_check
      _
    $region54: #{generator_forward.1} parent=5 // pred_check_branch
      %292 = sbr.rel (%p289) target = $region56
    $region55: #{generator_forward.1} parent=5 // pred_region
      %s293 = ssub.s32 %s15, 1
      %s294 = smul.u32 16, %s20
      %p295 = scmp.lt.s32.totalorder %s294, 31
      %s296 = scalar_select %p295, %s294, 31
      %s297 = smul.addr %s296, 4
      %s298 = scalar_lea.vmem %s0, %s297
      %p299 = pneg %p41
      %p300 = pneg %p38
      %p301 = pneg %p62
      %p302 = pneg %p59
      %p303 = pneg %p83
      %p304 = pneg %p80
      %p305 = pneg %p104
      %p306 = pneg %p101
      %p307 = pneg %p125
      %p308 = pneg %p122
      %p309 = pneg %p146
      %p310 = pneg %p143
      %p311 = pneg %p167
      %p312 = pneg %p164
      %p313 = pneg %p188
      %p314 = pneg %p185
      %p315 = pneg %p209
      %p316 = pneg %p206
      %p317 = pneg %p235
      %p318 = pneg %p232
      %s319 = smul.u32 16, %s20
      %p320 = scmp.lt.s32.totalorder %s319, 31
      %s321 = scalar_select %p320, %s319, 31
      %s322 = smul.addr %s321, 7
      %s323 = smul.addr %s322, 8
      %s324 = scalar_lea.vmem %s9, %s323
      %s325 = smul.u32 16, %s20
      %p326 = scmp.lt.s32.totalorder %s325, 31
      %s327 = scalar_select %p326, %s325, 31
      %s328 = smul.addr %s327, 4
      %s329 = scalar_lea.vmem %s0, %s328
      %s330 = smul.u32 16, %s20
      %s331 = smul.u32 16, %s20
      %p332 = scmp.lt.s32.totalorder %s331, 31
      %s333 = scalar_select %p332, %s331, 31
      %s334 = smul.addr %s333, 7
      %s335 = smul.addr %s334, 8
      %s336 = scalar_lea.vmem %s9, %s335
      %s337 = smul.u32 16, %s20
      %v339 = vld [vmem:[%s329] sm:$0xf]
      %v340 = vld [vmem:[%s329 + $0x4] sm:$0xf]
      %v341 = vld [vmem:[%s329 + $0x8] sm:$0xf]
      %v342 = vld [vmem:[%s329 + $0xc] sm:$0xf]
      %v343 = vld [vmem:[%s329 + $0x10] sm:$0xf]
      %v344 = vld [vmem:[%s329 + $0x14] sm:$0xf]
      %v345 = vld [vmem:[%s329 + $0x18] sm:$0xf]
      %v346 = vld [vmem:[%s329 + $0x1c] sm:$0xf]
      %v347 = vld [vmem:[%s329 + $0x20] sm:$0xf]
      %v348 = vld [vmem:[%s329 + $0x24] sm:$0xf]
      %v349 = vld [vmem:[%s329 + $0x28] sm:$0xf]
      %v350 = vld [vmem:[%s329 + $0x2c] sm:$0xf]
      %v351 = vld [vmem:[%s329 + $0x30] sm:$0xf]
      %v352 = vld [vmem:[%s329 + $0x34] sm:$0xf]
      %v353 = vld [vmem:[%s329 + $0x38] sm:$0xf]
      %v354 = vld [vmem:[%s329 + $0x3c] sm:$0xf]
      %v355 = vld [vmem:[%s1] sm:$0xf]
      %v356 = vld [vmem:[%s1 + $0x4] sm:$0xf]
      %v357 = vld [vmem:[%s1 + $0x8] sm:$0xf]
      %v358 = vld [vmem:[%s1 + $0xc] sm:$0xf]
      %v359 = vld [vmem:[%s1 + $0x10] sm:$0xf]
      %v360 = vld [vmem:[%s1 + $0x14] sm:$0xf]
      %v361 = vld [vmem:[%s1 + $0x18] sm:$0xf]
      %v362 = vld [vmem:[%s1 + $0x1c] sm:$0xf]
      %v363 = vld [vmem:[%s1 + $0x20] sm:$0xf]
      %v364 = vld [vmem:[%s1 + $0x24] sm:$0xf]
      %v365 = vld [vmem:[%s1 + $0x28] sm:$0xf]
      %v366 = vld [vmem:[%s1 + $0x2c] sm:$0xf]
      %v367 = vld [vmem:[%s1 + $0x30] sm:$0xf]
      %v368 = vld [vmem:[%s1 + $0x34] sm:$0xf]
      %v369 = vld [vmem:[%s1 + $0x38] sm:$0xf]
      %v370 = vld [vmem:[%s1 + $0x3c] sm:$0xf]
      %v371 = vld [vmem:[%s2] sm:$0x1]
      %v373 = vlaneseq
      %v374 = vshrl.u32 %v373, 7
      %v375 = vsub.s32 0, %v374
      %v376 = vrot.slane %v371, %v375
      %v394 = vunpack.c.l.b16 %v339
      %v395 = vunpack.c.l.b16 %v340
      %v396 = vunpack.c.l.b16 %v341
      %v397 = vunpack.c.l.b16 %v342
      %v398 = vunpack.c.l.b16 %v343
      %v399 = vunpack.c.l.b16 %v344
      %v400 = vunpack.c.l.b16 %v345
      %v401 = vunpack.c.l.b16 %v346
      %v402 = vunpack.c.l.b16 %v347
      %v403 = vunpack.c.l.b16 %v348
      %v404 = vunpack.c.l.b16 %v349
      %v405 = vunpack.c.l.b16 %v350
      %v406 = vunpack.c.l.b16 %v351
      %v407 = vunpack.c.l.b16 %v352
      %v408 = vunpack.c.l.b16 %v353
      %v409 = vunpack.c.l.b16 %v354
      %v410 = vpack.c.b16 %v395, %v394
      %v411 = vpack.c.b16 %v397, %v396
      %v412 = vpack.c.b16 %v399, %v398
      %v413 = vpack.c.b16 %v401, %v400
      %v414 = vpack.c.b16 %v403, %v402
      %v415 = vpack.c.b16 %v405, %v404
      %v416 = vpack.c.b16 %v407, %v406
      %v417 = vpack.c.b16 %v409, %v408
      %v442 = vunpack.c.l.b16 %v355
      %v443 = vunpack.c.l.b16 %v356
      %v444 = vunpack.c.l.b16 %v357
      %v445 = vunpack.c.l.b16 %v358
      %v446 = vunpack.c.l.b16 %v359
      %v447 = vunpack.c.l.b16 %v360
      %v448 = vunpack.c.l.b16 %v361
      %v449 = vunpack.c.l.b16 %v362
      %v450 = vunpack.c.l.b16 %v363
      %v451 = vunpack.c.l.b16 %v364
      %v452 = vunpack.c.l.b16 %v365
      %v453 = vunpack.c.l.b16 %v366
      %v454 = vunpack.c.l.b16 %v367
      %v455 = vunpack.c.l.b16 %v368
      %v456 = vunpack.c.l.b16 %v369
      %v457 = vunpack.c.l.b16 %v370
      %v458 = vpack.c.b16 %v443, %v442
      %v459 = vpack.c.b16 %v445, %v444
      %v460 = vpack.c.b16 %v447, %v446
      %v461 = vpack.c.b16 %v449, %v448
      %v462 = vpack.c.b16 %v451, %v450
      %v463 = vpack.c.b16 %v453, %v452
      %v464 = vpack.c.b16 %v455, %v454
      %v465 = vpack.c.b16 %v457, %v456
      %474 = vmatprep.subr.bf16.mxu0 0
      %475 = vmatpush1.bf16.msra.mxu0 %v458
      %476 = vmatprep.subr.bf16.mxu0 0
      %477 = vmatpush1.bf16.msra.mxu0 %v459
      %478 = vmatprep.subr.bf16.mxu0 0
      %479 = vmatpush1.bf16.msra.mxu0 %v460
      %480 = vmatprep.subr.bf16.mxu0 0
      %481 = vmatpush1.bf16.msra.mxu0 %v461
      %482 = vmatprep.subr.bf16.mxu0 0
      %483 = vmatpush1.bf16.msra.mxu0 %v462
      %484 = vmatprep.subr.bf16.mxu0 0
      %485 = vmatpush1.bf16.msra.mxu0 %v463
      %486 = vmatprep.subr.bf16.mxu0 0
      %487 = vmatpush1.bf16.msra.mxu0 %v464
      %488 = vmatprep.subr.bf16.mxu0 0
      %489 = vmatpush1.bf16.msra.mxu0 %v465
      %490 = vmatprep.subr.bf16.mxu0 0
      %491 = vmatpush1.bf16.msra.mxu0 0
      %492 = vmatprep.subr.bf16.mxu0 0
      %493 = vmatpush1.bf16.msra.mxu0 0
      %494 = vmatprep.subr.bf16.mxu0 0
      %495 = vmatpush1.bf16.msra.mxu0 0
      %496 = vmatprep.subr.bf16.mxu0 0
      %497 = vmatpush1.bf16.msra.mxu0 0
      %498 = vmatprep.subr.bf16.mxu0 0
      %499 = vmatpush1.bf16.msra.mxu0 0
      %500 = vmatprep.subr.bf16.mxu0 0
      %501 = vmatpush1.bf16.msra.mxu0 0
      %502 = vmatprep.subr.bf16.mxu0 0
      %503 = vmatpush1.bf16.msra.mxu0 0
      %504 = vmatprep.subr.bf16.mxu0 0
      %505 = vmatpush1.bf16.msra.mxu0 0
      %506 = vmatprep.mubr.bf16.mxu0 0
      %507 = vmatmul.mubr.bf16.gmra.mrb[0].mxu0 %v410
      %v508 = vpop.f32.mrb[0].mxu0
      %v509 = vadd.f32 %v376, %v508
      %v510 = vpop.f32.mrb[0].mxu0
      %v511 = vpop.f32.mrb[0].mxu0
      %v512 = vadd.f32 %v376, %v511
      %v513 = vpop.f32.mrb[0].mxu0
      %514 = vmatprep.mubr.bf16.mxu0 0
      %515 = vmatmul.mubr.bf16.gmra.mrb[0].mxu0 %v411
      %v516 = vpop.f32.mrb[0].mxu0
      %v517 = vadd.f32 %v376, %v516
      %v518 = vpop.f32.mrb[0].mxu0
      %v519 = vpop.f32.mrb[0].mxu0
      %v520 = vadd.f32 %v376, %v519
      %v521 = vpop.f32.mrb[0].mxu0
      %522 = vmatprep.mubr.bf16.mxu0 0
      %523 = vmatmul.mubr.bf16.gmra.mrb[0].mxu0 %v412
      %v524 = vpop.f32.mrb[0].mxu0
      %v525 = vadd.f32 %v376, %v524
      %v526 = vpop.f32.mrb[0].mxu0
      %v527 = vpop.f32.mrb[0].mxu0
      %v528 = vadd.f32 %v376, %v527
      %v529 = vpop.f32.mrb[0].mxu0
      %530 = vmatprep.mubr.bf16.mxu0 0
      %531 = vmatmul.mubr.bf16.gmra.mrb[0].mxu0 %v413
      %v532 = vpop.f32.mrb[0].mxu0
      %v533 = vadd.f32 %v376, %v532
      %v534 = vpop.f32.mrb[0].mxu0
      %v535 = vpop.f32.mrb[0].mxu0
      %v536 = vadd.f32 %v376, %v535
      %v537 = vpop.f32.mrb[0].mxu0
      %538 = vmatprep.mubr.bf16.mxu0 0
      %539 = vmatmul.mubr.bf16.gmra.mrb[0].mxu0 %v414
      %v540 = vpop.f32.mrb[0].mxu0
      %v541 = vadd.f32 %v376, %v540
      %v542 = vpop.f32.mrb[0].mxu0
      %v543 = vpop.f32.mrb[0].mxu0
      %v544 = vadd.f32 %v376, %v543
      %v545 = vpop.f32.mrb[0].mxu0
      %546 = vmatprep.mubr.bf16.mxu0 0
      %547 = vmatmul.mubr.bf16.gmra.mrb[0].mxu0 %v415
      %v548 = vpop.f32.mrb[0].mxu0
      %v549 = vadd.f32 %v376, %v548
      %v550 = vpop.f32.mrb[0].mxu0
      %v551 = vpop.f32.mrb[0].mxu0
      %v552 = vadd.f32 %v376, %v551
      %v553 = vpop.f32.mrb[0].mxu0
      %554 = vmatprep.mubr.bf16.mxu0 0
      %555 = vmatmul.mubr.bf16.gmra.mrb[0].mxu0 %v416
      %v556 = vpop.f32.mrb[0].mxu0
      %v557 = vadd.f32 %v376, %v556
      %v558 = vpop.f32.mrb[0].mxu0
      %v559 = vpop.f32.mrb[0].mxu0
      %v560 = vadd.f32 %v376, %v559
      %v561 = vpop.f32.mrb[0].mxu0
      %562 = vmatprep.mubr.bf16.mxu0 0
      %563 = vmatmul.mubr.bf16.gmra.mrb[0].mxu0 %v417
      %v564 = vpop.f32.mrb[0].mxu0
      %v565 = vadd.f32 %v376, %v564
      %v566 = vpop.f32.mrb[0].mxu0
      %v567 = vpop.f32.mrb[0].mxu0
      %v568 = vadd.f32 %v376, %v567
      %v569 = vpop.f32.mrb[0].mxu0
      %570 = vdwg.mxu0
      %vm571 = vcmp.gt.f32.partialorder %v509, 0.0
      %vm572 = vcmp.gt.f32.partialorder %v512, 0.0
      %vm573 = vcmp.gt.f32.partialorder %v517, 0.0
      %vm574 = vcmp.gt.f32.partialorder %v520, 0.0
      %vm575 = vcmp.gt.f32.partialorder %v525, 0.0
      %vm576 = vcmp.gt.f32.partialorder %v528, 0.0
      %vm577 = vcmp.gt.f32.partialorder %v533, 0.0
      %vm578 = vcmp.gt.f32.partialorder %v536, 0.0
      %vm579 = vcmp.gt.f32.partialorder %v541, 0.0
      %vm580 = vcmp.gt.f32.partialorder %v544, 0.0
      %vm581 = vcmp.gt.f32.partialorder %v549, 0.0
      %vm582 = vcmp.gt.f32.partialorder %v552, 0.0
      %vm583 = vcmp.gt.f32.partialorder %v557, 0.0
      %vm584 = vcmp.gt.f32.partialorder %v560, 0.0
      %vm585 = vcmp.gt.f32.partialorder %v565, 0.0
      %vm586 = vcmp.gt.f32.partialorder %v568, 0.0
      %v587 = vmul.f32 %v509, 0.2
      %v588 = vmul.f32 %v512, 0.2
      %v589 = vmul.f32 %v517, 0.2
      %v590 = vmul.f32 %v520, 0.2
      %v591 = vmul.f32 %v525, 0.2
      %v592 = vmul.f32 %v528, 0.2
      %v593 = vmul.f32 %v533, 0.2
      %v594 = vmul.f32 %v536, 0.2
      %v595 = vmul.f32 %v541, 0.2
      %v596 = vmul.f32 %v544, 0.2
      %v597 = vmul.f32 %v549, 0.2
      %v598 = vmul.f32 %v552, 0.2
      %v599 = vmul.f32 %v557, 0.2
      %v600 = vmul.f32 %v560, 0.2
      %v601 = vmul.f32 %v565, 0.2
      %v602 = vmul.f32 %v568, 0.2
      %v603 = vsel %vm571, %v509, %v587
      %v604 = vsel %vm572, %v512, %v588
      %v605 = vsel %vm573, %v517, %v589
      %v606 = vsel %vm574, %v520, %v590
      %v607 = vsel %vm575, %v525, %v591
      %v608 = vsel %vm576, %v528, %v592
      %v609 = vsel %vm577, %v533, %v593
      %v610 = vsel %vm578, %v536, %v594
      %v611 = vsel %vm579, %v541, %v595
      %v612 = vsel %vm580, %v544, %v596
      %v613 = vsel %vm581, %v549, %v597
      %v614 = vsel %vm582, %v552, %v598
      %v615 = vsel %vm583, %v557, %v599
      %v616 = vsel %vm584, %v560, %v600
      %v617 = vsel %vm585, %v565, %v601
      %v618 = vsel %vm586, %v568, %v602
      %v619 = vpack.c.bf16 %v604, %v603
      %v620 = vpack.c.bf16 %v606, %v605
      %v621 = vpack.c.bf16 %v608, %v607
      %v622 = vpack.c.bf16 %v610, %v609
      %v623 = vpack.c.bf16 %v612, %v611
      %v624 = vpack.c.bf16 %v614, %v613
      %v625 = vpack.c.bf16 %v616, %v615
      %v626 = vpack.c.bf16 %v618, %v617
      %v627 = vld [vmem:[%s3] sm:$0xf]
      %v628 = vld [vmem:[%s3 + $0x4] sm:$0xf]
      %v629 = vld [vmem:[%s3 + $0x8] sm:$0xf]
      %v630 = vld [vmem:[%s3 + $0xc] sm:$0xf]
      %v631 = vld [vmem:[%s3 + $0x10] sm:$0xf]
      %v632 = vld [vmem:[%s3 + $0x14] sm:$0xf]
      %v633 = vld [vmem:[%s3 + $0x18] sm:$0xf]
      %v634 = vld [vmem:[%s3 + $0x1c] sm:$0xf]
      %v635 = vld [vmem:[%s3 + $0x20] sm:$0xf]
      %v636 = vld [vmem:[%s3 + $0x24] sm:$0xf]
      %v637 = vld [vmem:[%s3 + $0x28] sm:$0xf]
      %v638 = vld [vmem:[%s3 + $0x2c] sm:$0xf]
      %v639 = vld [vmem:[%s3 + $0x30] sm:$0xf]
      %v640 = vld [vmem:[%s3 + $0x34] sm:$0xf]
      %v641 = vld [vmem:[%s3 + $0x38] sm:$0xf]
      %v642 = vld [vmem:[%s3 + $0x3c] sm:$0xf]
      %v643 = vld [vmem:[%s4] sm:$0x1]
      %v645 = vlaneseq
      %v646 = vshrl.u32 %v645, 7
      %v647 = vsub.s32 0, %v646
      %v648 = vrot.slane %v643, %v647
      %v666 = vunpack.c.l.b16 %v627
      %v667 = vunpack.c.l.b16 %v628
      %v668 = vunpack.c.l.b16 %v629
      %v669 = vunpack.c.l.b16 %v630
      %v670 = vunpack.c.l.b16 %v631
      %v671 = vunpack.c.l.b16 %v632
      %v672 = vunpack.c.l.b16 %v633
      %v673 = vunpack.c.l.b16 %v634
      %v674 = vunpack.c.l.b16 %v635
      %v675 = vunpack.c.l.b16 %v636
      %v676 = vunpack.c.l.b16 %v637
      %v677 = vunpack.c.l.b16 %v638
      %v678 = vunpack.c.l.b16 %v639
      %v679 = vunpack.c.l.b16 %v640
      %v680 = vunpack.c.l.b16 %v641
      %v681 = vunpack.c.l.b16 %v642
      %v682 = vpack.c.b16 %v667, %v666
      %v683 = vpack.c.b16 %v669, %v668
      %v684 = vpack.c.b16 %v671, %v670
      %v685 = vpack.c.b16 %v673, %v672
      %v686 = vpack.c.b16 %v675, %v674
      %v687 = vpack.c.b16 %v677, %v676
      %v688 = vpack.c.b16 %v679, %v678
      %v689 = vpack.c.b16 %v681, %v680
      %698 = vmatprep.subr.bf16.mxu0 0
      %699 = vmatpush1.bf16.msra.mxu0 %v682
      %700 = vmatprep.subr.bf16.mxu0 0
      %701 = vmatpush1.bf16.msra.mxu0 %v683
      %702 = vmatprep.subr.bf16.mxu0 0
      %703 = vmatpush1.bf16.msra.mxu0 %v684
      %704 = vmatprep.subr.bf16.mxu0 0
      %705 = vmatpush1.bf16.msra.mxu0 %v685
      %706 = vmatprep.subr.bf16.mxu0 0
      %707 = vmatpush1.bf16.msra.mxu0 %v686
      %708 = vmatprep.subr.bf16.mxu0 0
      %709 = vmatpush1.bf16.msra.mxu0 %v687
      %710 = vmatprep.subr.bf16.mxu0 0
      %711 = vmatpush1.bf16.msra.mxu0 %v688
      %712 = vmatprep.subr.bf16.mxu0 0
      %713 = vmatpush1.bf16.msra.mxu0 %v689
      %714 = vmatprep.subr.bf16.mxu0 0
      %715 = vmatpush1.bf16.msra.mxu0 0
      %716 = vmatprep.subr.bf16.mxu0 0
      %717 = vmatpush1.bf16.msra.mxu0 0
      %718 = vmatprep.subr.bf16.mxu0 0
      %719 = vmatpush1.bf16.msra.mxu0 0
      %720 = vmatprep.subr.bf16.mxu0 0
      %721 = vmatpush1.bf16.msra.mxu0 0
      %722 = vmatprep.subr.bf16.mxu0 0
      %723 = vmatpush1.bf16.msra.mxu0 0
      %724 = vmatprep.subr.bf16.mxu0 0
      %725 = vmatpush1.bf16.msra.mxu0 0
      %726 = vmatprep.subr.bf16.mxu0 0
      %727 = vmatpush1.bf16.msra.mxu0 0
      %728 = vmatprep.subr.bf16.mxu0 0
      %729 = vmatpush1.bf16.msra.mxu0 0
      %730 = vmatprep.mubr.bf16.mxu0 0
      %731 = vmatmul.mubr.bf16.gmra.mrb[0].mxu0 %v619
      %v732 = vpop.f32.mrb[0].mxu0
      %v733 = vadd.f32 %v648, %v732
      %v734 = vpop.f32.mrb[0].mxu0
      %v735 = vpop.f32.mrb[0].mxu0
      %v736 = vadd.f32 %v648, %v735
      %v737 = vpop.f32.mrb[0].mxu0
      %738 = vmatprep.mubr.bf16.mxu0 0
      %739 = vmatmul.mubr.bf16.gmra.mrb[0].mxu0 %v620
      %v740 = vpop.f32.mrb[0].mxu0
      %v741 = vadd.f32 %v648, %v740
      %v742 = vpop.f32.mrb[0].mxu0
      %v743 = vpop.f32.mrb[0].mxu0
      %v744 = vadd.f32 %v648, %v743
      %v745 = vpop.f32.mrb[0].mxu0
      %746 = vmatprep.mubr.bf16.mxu0 0
      %747 = vmatmul.mubr.bf16.gmra.mrb[0].mxu0 %v621
      %v748 = vpop.f32.mrb[0].mxu0
      %v749 = vadd.f32 %v648, %v748
      %v750 = vpop.f32.mrb[0].mxu0
      %v751 = vpop.f32.mrb[0].mxu0
      %v752 = vadd.f32 %v648, %v751
      %v753 = vpop.f32.mrb[0].mxu0
      %754 = vmatprep.mubr.bf16.mxu0 0
      %755 = vmatmul.mubr.bf16.gmra.mrb[0].mxu0 %v622
      %v756 = vpop.f32.mrb[0].mxu0
      %v757 = vadd.f32 %v648, %v756
      %v758 = vpop.f32.mrb[0].mxu0
      %v759 = vpop.f32.mrb[0].mxu0
      %v760 = vadd.f32 %v648, %v759
      %v761 = vpop.f32.mrb[0].mxu0
      %762 = vmatprep.mubr.bf16.mxu0 0
      %763 = vmatmul.mubr.bf16.gmra.mrb[0].mxu0 %v623
      %v764 = vpop.f32.mrb[0].mxu0
      %v765 = vadd.f32 %v648, %v764
      %v766 = vpop.f32.mrb[0].mxu0
      %v767 = vpop.f32.mrb[0].mxu0
      %v768 = vadd.f32 %v648, %v767
      %v769 = vpop.f32.mrb[0].mxu0
      %770 = vmatprep.mubr.bf16.mxu0 0
      %771 = vmatmul.mubr.bf16.gmra.mrb[0].mxu0 %v624
      %v772 = vpop.f32.mrb[0].mxu0
      %v773 = vadd.f32 %v648, %v772
      %v774 = vpop.f32.mrb[0].mxu0
      %v775 = vpop.f32.mrb[0].mxu0
      %v776 = vadd.f32 %v648, %v775
      %v777 = vpop.f32.mrb[0].mxu0
      %778 = vmatprep.mubr.bf16.mxu0 0
      %779 = vmatmul.mubr.bf16.gmra.mrb[0].mxu0 %v625
      %v780 = vpop.f32.mrb[0].mxu0
      %v781 = vadd.f32 %v648, %v780
      %v782 = vpop.f32.mrb[0].mxu0
      %v783 = vpop.f32.mrb[0].mxu0
      %v784 = vadd.f32 %v648, %v783
      %v785 = vpop.f32.mrb[0].mxu0
      %786 = vmatprep.mubr.bf16.mxu0 0
      %787 = vmatmul.mubr.bf16.gmra.mrb[0].mxu0 %v626
      %v788 = vpop.f32.mrb[0].mxu0
      %v789 = vadd.f32 %v648, %v788
      %v790 = vpop.f32.mrb[0].mxu0
      %v791 = vpop.f32.mrb[0].mxu0
      %v792 = vadd.f32 %v648, %v791
      %v793 = vpop.f32.mrb[0].mxu0
      %794 = vdwg.mxu0
      %vm795 = vcmp.gt.f32.partialorder %v733, 0.0
      %vm796 = vcmp.gt.f32.partialorder %v736, 0.0
      %vm797 = vcmp.gt.f32.partialorder %v741, 0.0
      %vm798 = vcmp.gt.f32.partialorder %v744, 0.0
      %vm799 = vcmp.gt.f32.partialorder %v749, 0.0
      %vm800 = vcmp.gt.f32.partialorder %v752, 0.0
      %vm801 = vcmp.gt.f32.partialorder %v757, 0.0
      %vm802 = vcmp.gt.f32.partialorder %v760, 0.0
      %vm803 = vcmp.gt.f32.partialorder %v765, 0.0
      %vm804 = vcmp.gt.f32.partialorder %v768, 0.0
      %vm805 = vcmp.gt.f32.partialorder %v773, 0.0
      %vm806 = vcmp.gt.f32.partialorder %v776, 0.0
      %vm807 = vcmp.gt.f32.partialorder %v781, 0.0
      %vm808 = vcmp.gt.f32.partialorder %v784, 0.0
      %vm809 = vcmp.gt.f32.partialorder %v789, 0.0
      %vm810 = vcmp.gt.f32.partialorder %v792, 0.0
      %v811 = vmul.f32 %v733, 0.2
      %v812 = vmul.f32 %v736, 0.2
      %v813 = vmul.f32 %v741, 0.2
      %v814 = vmul.f32 %v744, 0.2
      %v815 = vmul.f32 %v749, 0.2
      %v816 = vmul.f32 %v752, 0.2
      %v817 = vmul.f32 %v757, 0.2
      %v818 = vmul.f32 %v760, 0.2
      %v819 = vmul.f32 %v765, 0.2
      %v820 = vmul.f32 %v768, 0.2
      %v821 = vmul.f32 %v773, 0.2
      %v822 = vmul.f32 %v776, 0.2
      %v823 = vmul.f32 %v781, 0.2
      %v824 = vmul.f32 %v784, 0.2
      %v825 = vmul.f32 %v789, 0.2
      %v826 = vmul.f32 %v792, 0.2
      %v827 = vsel %vm795, %v733, %v811
      %v828 = vsel %vm796, %v736, %v812
      %v829 = vsel %vm797, %v741, %v813
      %v830 = vsel %vm798, %v744, %v814
      %v831 = vsel %vm799, %v749, %v815
      %v832 = vsel %vm800, %v752, %v816
      %v833 = vsel %vm801, %v757, %v817
      %v834 = vsel %vm802, %v760, %v818
      %v835 = vsel %vm803, %v765, %v819
      %v836 = vsel %vm804, %v768, %v820
      %v837 = vsel %vm805, %v773, %v821
      %v838 = vsel %vm806, %v776, %v822
      %v839 = vsel %vm807, %v781, %v823
      %v840 = vsel %vm808, %v784, %v824
      %v841 = vsel %vm809, %v789, %v825
      %v842 = vsel %vm810, %v792, %v826
      %v843 = vpack.c.bf16 %v828, %v827
      %v844 = vpack.c.bf16 %v830, %v829
      %v845 = vpack.c.bf16 %v832, %v831
      %v846 = vpack.c.bf16 %v834, %v833
      %v847 = vpack.c.bf16 %v836, %v835
      %v848 = vpack.c.bf16 %v838, %v837
      %v849 = vpack.c.bf16 %v840, %v839
      %v850 = vpack.c.bf16 %v842, %v841
      %v851 = vld [vmem:[%s5] sm:$0xf]
      %v852 = vld [vmem:[%s5 + $0x4] sm:$0xf]
      %v853 = vld [vmem:[%s5 + $0x8] sm:$0xf]
      %v854 = vld [vmem:[%s5 + $0xc] sm:$0xf]
      %v855 = vld [vmem:[%s5 + $0x10] sm:$0xf]
      %v856 = vld [vmem:[%s5 + $0x14] sm:$0xf]
      %v857 = vld [vmem:[%s5 + $0x18] sm:$0xf]
      %v858 = vld [vmem:[%s5 + $0x1c] sm:$0xf]
      %v859 = vld [vmem:[%s5 + $0x20] sm:$0xf]
      %v860 = vld [vmem:[%s5 + $0x24] sm:$0xf]
      %v861 = vld [vmem:[%s5 + $0x28] sm:$0xf]
      %v862 = vld [vmem:[%s5 + $0x2c] sm:$0xf]
      %v863 = vld [vmem:[%s5 + $0x30] sm:$0xf]
      %v864 = vld [vmem:[%s5 + $0x34] sm:$0xf]
      %v865 = vld [vmem:[%s5 + $0x38] sm:$0xf]
      %v866 = vld [vmem:[%s5 + $0x3c] sm:$0xf]
      %v867 = vld [vmem:[%s6] sm:$0x1]
      %v869 = vlaneseq
      %v870 = vshrl.u32 %v869, 7
      %v871 = vsub.s32 0, %v870
      %v872 = vrot.slane %v867, %v871
      %v890 = vunpack.c.l.b16 %v851
      %v891 = vunpack.c.l.b16 %v852
      %v892 = vunpack.c.l.b16 %v853
      %v893 = vunpack.c.l.b16 %v854
      %v894 = vunpack.c.l.b16 %v855
      %v895 = vunpack.c.l.b16 %v856
      %v896 = vunpack.c.l.b16 %v857
      %v897 = vunpack.c.l.b16 %v858
      %v898 = vunpack.c.l.b16 %v859
      %v899 = vunpack.c.l.b16 %v860
      %v900 = vunpack.c.l.b16 %v861
      %v901 = vunpack.c.l.b16 %v862
      %v902 = vunpack.c.l.b16 %v863
      %v903 = vunpack.c.l.b16 %v864
      %v904 = vunpack.c.l.b16 %v865
      %v905 = vunpack.c.l.b16 %v866
      %v906 = vpack.c.b16 %v891, %v890
      %v907 = vpack.c.b16 %v893, %v892
      %v908 = vpack.c.b16 %v895, %v894
      %v909 = vpack.c.b16 %v897, %v896
      %v910 = vpack.c.b16 %v899, %v898
      %v911 = vpack.c.b16 %v901, %v900
      %v912 = vpack.c.b16 %v903, %v902
      %v913 = vpack.c.b16 %v905, %v904
      %922 = vmatprep.subr.bf16.mxu0 0
      %923 = vmatpush1.bf16.msra.mxu0 %v906
      %924 = vmatprep.subr.bf16.mxu0 0
      %925 = vmatpush1.bf16.msra.mxu0 %v907
      %926 = vmatprep.subr.bf16.mxu0 0
      %927 = vmatpush1.bf16.msra.mxu0 %v908
      %928 = vmatprep.subr.bf16.mxu0 0
      %929 = vmatpush1.bf16.msra.mxu0 %v909
      %930 = vmatprep.subr.bf16.mxu0 0
      %931 = vmatpush1.bf16.msra.mxu0 %v910
      %932 = vmatprep.subr.bf16.mxu0 0
      %933 = vmatpush1.bf16.msra.mxu0 %v911
      %934 = vmatprep.subr.bf16.mxu0 0
      %935 = vmatpush1.bf16.msra.mxu0 %v912
      %936 = vmatprep.subr.bf16.mxu0 0
      %937 = vmatpush1.bf16.msra.mxu0 %v913
      %938 = vmatprep.subr.bf16.mxu0 0
      %939 = vmatpush1.bf16.msra.mxu0 0
      %940 = vmatprep.subr.bf16.mxu0 0
      %941 = vmatpush1.bf16.msra.mxu0 0
      %942 = vmatprep.subr.bf16.mxu0 0
      %943 = vmatpush1.bf16.msra.mxu0 0
      %944 = vmatprep.subr.bf16.mxu0 0
      %945 = vmatpush1.bf16.msra.mxu0 0
      %946 = vmatprep.subr.bf16.mxu0 0
      %947 = vmatpush1.bf16.msra.mxu0 0
      %948 = vmatprep.subr.bf16.mxu0 0
      %949 = vmatpush1.bf16.msra.mxu0 0
      %950 = vmatprep.subr.bf16.mxu0 0
      %951 = vmatpush1.bf16.msra.mxu0 0
      %952 = vmatprep.subr.bf16.mxu0 0
      %953 = vmatpush1.bf16.msra.mxu0 0
      %954 = vmatprep.mubr.bf16.mxu0 0
      %955 = vmatmul.mubr.bf16.gmra.mrb[0].mxu0 %v843
      %v956 = vpop.f32.mrb[0].mxu0
      %v957 = vadd.f32 %v872, %v956
      %v958 = vpop.f32.mrb[0].mxu0
      %v959 = vpop.f32.mrb[0].mxu0
      %v960 = vadd.f32 %v872, %v959
      %v961 = vpop.f32.mrb[0].mxu0
      %962 = vmatprep.mubr.bf16.mxu0 0
      %963 = vmatmul.mubr.bf16.gmra.mrb[0].mxu0 %v844
      %v964 = vpop.f32.mrb[0].mxu0
      %v965 = vadd.f32 %v872, %v964
      %v966 = vpop.f32.mrb[0].mxu0
      %v967 = vpop.f32.mrb[0].mxu0
      %v968 = vadd.f32 %v872, %v967
      %v969 = vpop.f32.mrb[0].mxu0
      %970 = vmatprep.mubr.bf16.mxu0 0
      %971 = vmatmul.mubr.bf16.gmra.mrb[0].mxu0 %v845
      %v972 = vpop.f32.mrb[0].mxu0
      %v973 = vadd.f32 %v872, %v972
      %v974 = vpop.f32.mrb[0].mxu0
      %v975 = vpop.f32.mrb[0].mxu0
      %v976 = vadd.f32 %v872, %v975
      %v977 = vpop.f32.mrb[0].mxu0
      %978 = vmatprep.mubr.bf16.mxu0 0
      %979 = vmatmul.mubr.bf16.gmra.mrb[0].mxu0 %v846
      %v980 = vpop.f32.mrb[0].mxu0
      %v981 = vadd.f32 %v872, %v980
      %v982 = vpop.f32.mrb[0].mxu0
      %v983 = vpop.f32.mrb[0].mxu0
      %v984 = vadd.f32 %v872, %v983
      %v985 = vpop.f32.mrb[0].mxu0
      %986 = vmatprep.mubr.bf16.mxu0 0
      %987 = vmatmul.mubr.bf16.gmra.mrb[0].mxu0 %v847
      %v988 = vpop.f32.mrb[0].mxu0
      %v989 = vadd.f32 %v872, %v988
      %v990 = vpop.f32.mrb[0].mxu0
      %v991 = vpop.f32.mrb[0].mxu0
      %v992 = vadd.f32 %v872, %v991
      %v993 = vpop.f32.mrb[0].mxu0
      %994 = vmatprep.mubr.bf16.mxu0 0
      %995 = vmatmul.mubr.bf16.gmra.mrb[0].mxu0 %v848
      %v996 = vpop.f32.mrb[0].mxu0
      %v997 = vadd.f32 %v872, %v996
      %v998 = vpop.f32.mrb[0].mxu0
      %v999 = vpop.f32.mrb[0].mxu0
      %v1000 = vadd.f32 %v872, %v999
      %v1001 = vpop.f32.mrb[0].mxu0
      %1002 = vmatprep.mubr.bf16.mxu0 0
      %1003 = vmatmul.mubr.bf16.gmra.mrb[0].mxu0 %v849
      %v1004 = vpop.f32.mrb[0].mxu0
      %v1005 = vadd.f32 %v872, %v1004
      %v1006 = vpop.f32.mrb[0].mxu0
      %v1007 = vpop.f32.mrb[0].mxu0
      %v1008 = vadd.f32 %v872, %v1007
      %v1009 = vpop.f32.mrb[0].mxu0
      %1010 = vmatprep.mubr.bf16.mxu0 0
      %1011 = vmatmul.mubr.bf16.gmra.mrb[0].mxu0 %v850
      %v1012 = vpop.f32.mrb[0].mxu0
      %v1013 = vadd.f32 %v872, %v1012
      %v1014 = vpop.f32.mrb[0].mxu0
      %v1015 = vpop.f32.mrb[0].mxu0
      %v1016 = vadd.f32 %v872, %v1015
      %v1017 = vpop.f32.mrb[0].mxu0
      %1018 = vdwg.mxu0
      %vm1019 = vcmp.gt.f32.partialorder %v957, 0.0
      %vm1020 = vcmp.gt.f32.partialorder %v960, 0.0
      %vm1021 = vcmp.gt.f32.partialorder %v965, 0.0
      %vm1022 = vcmp.gt.f32.partialorder %v968, 0.0
      %vm1023 = vcmp.gt.f32.partialorder %v973, 0.0
      %vm1024 = vcmp.gt.f32.partialorder %v976, 0.0
      %vm1025 = vcmp.gt.f32.partialorder %v981, 0.0
      %vm1026 = vcmp.gt.f32.partialorder %v984, 0.0
      %vm1027 = vcmp.gt.f32.partialorder %v989, 0.0
      %vm1028 = vcmp.gt.f32.partialorder %v992, 0.0
      %vm1029 = vcmp.gt.f32.partialorder %v997, 0.0
      %vm1030 = vcmp.gt.f32.partialorder %v1000, 0.0
      %vm1031 = vcmp.gt.f32.partialorder %v1005, 0.0
      %vm1032 = vcmp.gt.f32.partialorder %v1008, 0.0
      %vm1033 = vcmp.gt.f32.partialorder %v1013, 0.0
      %vm1034 = vcmp.gt.f32.partialorder %v1016, 0.0
      %v1035 = vmul.f32 %v957, 0.2
      %v1036 = vmul.f32 %v960, 0.2
      %v1037 = vmul.f32 %v965, 0.2
      %v1038 = vmul.f32 %v968, 0.2
      %v1039 = vmul.f32 %v973, 0.2
      %v1040 = vmul.f32 %v976, 0.2
      %v1041 = vmul.f32 %v981, 0.2
      %v1042 = vmul.f32 %v984, 0.2
      %v1043 = vmul.f32 %v989, 0.2
      %v1044 = vmul.f32 %v992, 0.2
      %v1045 = vmul.f32 %v997, 0.2
      %v1046 = vmul.f32 %v1000, 0.2
      %v1047 = vmul.f32 %v1005, 0.2
      %v1048 = vmul.f32 %v1008, 0.2
      %v1049 = vmul.f32 %v1013, 0.2
      %v1050 = vmul.f32 %v1016, 0.2
      %v1051 = vsel %vm1019, %v957, %v1035
      %v1052 = vsel %vm1020, %v960, %v1036
      %v1053 = vsel %vm1021, %v965, %v1037
      %v1054 = vsel %vm1022, %v968, %v1038
      %v1055 = vsel %vm1023, %v973, %v1039
      %v1056 = vsel %vm1024, %v976, %v1040
      %v1057 = vsel %vm1025, %v981, %v1041
      %v1058 = vsel %vm1026, %v984, %v1042
      %v1059 = vsel %vm1027, %v989, %v1043
      %v1060 = vsel %vm1028, %v992, %v1044
      %v1061 = vsel %vm1029, %v997, %v1045
      %v1062 = vsel %vm1030, %v1000, %v1046
      %v1063 = vsel %vm1031, %v1005, %v1047
      %v1064 = vsel %vm1032, %v1008, %v1048
      %v1065 = vsel %vm1033, %v1013, %v1049
      %v1066 = vsel %vm1034, %v1016, %v1050
      %v1067 = vpack.c.bf16 %v1052, %v1051
      %v1068 = vpack.c.bf16 %v1054, %v1053
      %v1069 = vpack.c.bf16 %v1056, %v1055
      %v1070 = vpack.c.bf16 %v1058, %v1057
      %v1071 = vpack.c.bf16 %v1060, %v1059
      %v1072 = vpack.c.bf16 %v1062, %v1061
      %v1073 = vpack.c.bf16 %v1064, %v1063
      %v1074 = vpack.c.bf16 %v1066, %v1065
      %v1075 = vld [vmem:[%s7] sm:$0xff]
      %v1076 = vld [vmem:[%s7 + $0x8] sm:$0xff]
      %v1077 = vld [vmem:[%s7 + $0x10] sm:$0xff]
      %v1078 = vld [vmem:[%s7 + $0x18] sm:$0xf]
      %v1079 = vld [vmem:[%s7 + $0x1c] sm:$0xff]
      %v1080 = vld [vmem:[%s7 + $0x24] sm:$0xff]
      %v1081 = vld [vmem:[%s7 + $0x2c] sm:$0xff]
      %v1082 = vld [vmem:[%s7 + $0x34] sm:$0xf]
      %v1083 = vld [vmem:[%s7 + $0x38] sm:$0xff]
      %v1084 = vld [vmem:[%s7 + $0x40] sm:$0xff]
      %v1085 = vld [vmem:[%s7 + $0x48] sm:$0xff]
      %v1086 = vld [vmem:[%s7 + $0x50] sm:$0xf]
      %v1087 = vld [vmem:[%s7 + $0x54] sm:$0xff]
      %v1088 = vld [vmem:[%s7 + $0x5c] sm:$0xff]
      %v1089 = vld [vmem:[%s7 + $0x64] sm:$0xff]
      %v1090 = vld [vmem:[%s7 + $0x6c] sm:$0xf]
      %v1091 = vld [vmem:[%s7 + $0x70] sm:$0xff]
      %v1092 = vld [vmem:[%s7 + $0x78] sm:$0xff]
      %v1093 = vld [vmem:[%s7 + $0x80] sm:$0xff]
      %v1094 = vld [vmem:[%s7 + $0x88] sm:$0xf]
      %v1095 = vld [vmem:[%s7 + $0x8c] sm:$0xff]
      %v1096 = vld [vmem:[%s7 + $0x94] sm:$0xff]
      %v1097 = vld [vmem:[%s7 + $0x9c] sm:$0xff]
      %v1098 = vld [vmem:[%s7 + $0xa4] sm:$0xf]
      %v1099 = vld [vmem:[%s7 + $0xa8] sm:$0xff]
      %v1100 = vld [vmem:[%s7 + $0xb0] sm:$0xff]
      %v1101 = vld [vmem:[%s7 + $0xb8] sm:$0xff]
      %v1102 = vld [vmem:[%s7 + $0xc0] sm:$0xf]
      %v1103 = vld [vmem:[%s7 + $0xc4] sm:$0xff]
      %v1104 = vld [vmem:[%s7 + $0xcc] sm:$0xff]
      %v1105 = vld [vmem:[%s7 + $0xd4] sm:$0xff]
      %v1106 = vld [vmem:[%s7 + $0xdc] sm:$0xf]
      %v1107 = vld [vmem:[%s7 + $0xe0] sm:$0xff]
      %v1108 = vld [vmem:[%s7 + $0xe8] sm:$0xff]
      %v1109 = vld [vmem:[%s7 + $0xf0] sm:$0xff]
      %v1110 = vld [vmem:[%s7 + $0xf8] sm:$0xf]
      %v1111 = vld [vmem:[%s7 + $0xfc] sm:$0xff]
      %v1112 = vld [vmem:[%s7 + $0x104] sm:$0xff]
      %v1113 = vld [vmem:[%s7 + $0x10c] sm:$0xff]
      %v1114 = vld [vmem:[%s7 + $0x114] sm:$0xf]
      %v1115 = vld [vmem:[%s7 + $0x118] sm:$0xff]
      %v1116 = vld [vmem:[%s7 + $0x120] sm:$0xff]
      %v1117 = vld [vmem:[%s7 + $0x128] sm:$0xff]
      %v1118 = vld [vmem:[%s7 + $0x130] sm:$0xf]
      %v1119 = vld [vmem:[%s7 + $0x134] sm:$0xff]
      %v1120 = vld [vmem:[%s7 + $0x13c] sm:$0xff]
      %v1121 = vld [vmem:[%s7 + $0x144] sm:$0xff]
      %v1122 = vld [vmem:[%s7 + $0x14c] sm:$0xf]
      %v1123 = vld [vmem:[%s7 + $0x150] sm:$0xff]
      %v1124 = vld [vmem:[%s7 + $0x158] sm:$0xff]
      %v1125 = vld [vmem:[%s7 + $0x160] sm:$0xff]
      %v1126 = vld [vmem:[%s7 + $0x168] sm:$0xf]
      %v1127 = vld [vmem:[%s7 + $0x16c] sm:$0xff]
      %v1128 = vld [vmem:[%s7 + $0x174] sm:$0xff]
      %v1129 = vld [vmem:[%s7 + $0x17c] sm:$0xff]
      %v1130 = vld [vmem:[%s7 + $0x184] sm:$0xf]
      %v1131 = vld [vmem:[%s7 + $0x188] sm:$0xff]
      %v1132 = vld [vmem:[%s7 + $0x190] sm:$0xff]
      %v1133 = vld [vmem:[%s7 + $0x198] sm:$0xff]
      %v1134 = vld [vmem:[%s7 + $0x1a0] sm:$0xf]
      %v1135 = vld [vmem:[%s7 + $0x1a4] sm:$0xff]
      %v1136 = vld [vmem:[%s7 + $0x1ac] sm:$0xff]
      %v1137 = vld [vmem:[%s7 + $0x1b4] sm:$0xff]
      %v1138 = vld [vmem:[%s7 + $0x1bc] sm:$0xf]
      %v1139 = vld [vmem:[%s8] sm:$0xff]
      %v1141 = vlaneseq
      %v1142 = vshrl.u32 %v1141, 7
      %v1143 = vsub.s32 0, %v1142
      %v1144 = vrot.slane %v1139, %v1143
      %v1145 = vlaneseq
      %v1146 = vshrl.u32 %v1145, 7
      %v1147 = vsub.s32 1, %v1146
      %v1148 = vrot.slane %v1139, %v1147
      %v1149 = vlaneseq
      %v1150 = vshrl.u32 %v1149, 7
      %v1151 = vsub.s32 2, %v1150
      %v1152 = vrot.slane %v1139, %v1151
      %v1153 = vlaneseq
      %v1154 = vshrl.u32 %v1153, 7
      %v1155 = vsub.s32 3, %v1154
      %v1156 = vrot.slane %v1139, %v1155
      %v1157 = vlaneseq
      %v1158 = vshrl.u32 %v1157, 7
      %v1159 = vsub.s32 4, %v1158
      %v1160 = vrot.slane %v1139, %v1159
      %v1161 = vlaneseq
      %v1162 = vshrl.u32 %v1161, 7
      %v1163 = vsub.s32 5, %v1162
      %v1164 = vrot.slane %v1139, %v1163
      %v1165 = vlaneseq
      %v1166 = vshrl.u32 %v1165, 7
      %v1167 = vsub.s32 6, %v1166
      %v1168 = vrot.slane %v1139, %v1167
      %v1240 = vunpack.c.l.b16 %v1075
      %v1241 = vunpack.c.h.b16 %v1075
      %v1242 = vunpack.c.l.b16 %v1076
      %v1243 = vunpack.c.h.b16 %v1076
      %v1244 = vunpack.c.l.b16 %v1077
      %v1245 = vunpack.c.h.b16 %v1077
      %v1246 = vunpack.c.l.b16 %v1078
      %v1247 = vunpack.c.l.b16 %v1079
      %v1248 = vunpack.c.h.b16 %v1079
      %v1249 = vunpack.c.l.b16 %v1080
      %v1250 = vunpack.c.h.b16 %v1080
      %v1251 = vunpack.c.l.b16 %v1081
      %v1252 = vunpack.c.h.b16 %v1081
      %v1253 = vunpack.c.l.b16 %v1082
      %v1254 = vunpack.c.l.b16 %v1083
      %v1255 = vunpack.c.h.b16 %v1083
      %v1256 = vunpack.c.l.b16 %v1084
      %v1257 = vunpack.c.h.b16 %v1084
      %v1258 = vunpack.c.l.b16 %v1085
      %v1259 = vunpack.c.h.b16 %v1085
      %v1260 = vunpack.c.l.b16 %v1086
      %v1261 = vunpack.c.l.b16 %v1087
      %v1262 = vunpack.c.h.b16 %v1087
      %v1263 = vunpack.c.l.b16 %v1088
      %v1264 = vunpack.c.h.b16 %v1088
      %v1265 = vunpack.c.l.b16 %v1089
      %v1266 = vunpack.c.h.b16 %v1089
      %v1267 = vunpack.c.l.b16 %v1090
      %v1268 = vunpack.c.l.b16 %v1091
      %v1269 = vunpack.c.h.b16 %v1091
      %v1270 = vunpack.c.l.b16 %v1092
      %v1271 = vunpack.c.h.b16 %v1092
      %v1272 = vunpack.c.l.b16 %v1093
      %v1273 = vunpack.c.h.b16 %v1093
      %v1274 = vunpack.c.l.b16 %v1094
      %v1275 = vunpack.c.l.b16 %v1095
      %v1276 = vunpack.c.h.b16 %v1095
      %v1277 = vunpack.c.l.b16 %v1096
      %v1278 = vunpack.c.h.b16 %v1096
      %v1279 = vunpack.c.l.b16 %v1097
      %v1280 = vunpack.c.h.b16 %v1097
      %v1281 = vunpack.c.l.b16 %v1098
      %v1282 = vunpack.c.l.b16 %v1099
      %v1283 = vunpack.c.h.b16 %v1099
      %v1284 = vunpack.c.l.b16 %v1100
      %v1285 = vunpack.c.h.b16 %v1100
      %v1286 = vunpack.c.l.b16 %v1101
      %v1287 = vunpack.c.h.b16 %v1101
      %v1288 = vunpack.c.l.b16 %v1102
      %v1289 = vunpack.c.l.b16 %v1103
      %v1290 = vunpack.c.h.b16 %v1103
      %v1291 = vunpack.c.l.b16 %v1104
      %v1292 = vunpack.c.h.b16 %v1104
      %v1293 = vunpack.c.l.b16 %v1105
      %v1294 = vunpack.c.h.b16 %v1105
      %v1295 = vunpack.c.l.b16 %v1106
      %v1296 = vunpack.c.l.b16 %v1107
      %v1297 = vunpack.c.h.b16 %v1107
      %v1298 = vunpack.c.l.b16 %v1108
      %v1299 = vunpack.c.h.b16 %v1108
      %v1300 = vunpack.c.l.b16 %v1109
      %v1301 = vunpack.c.h.b16 %v1109
      %v1302 = vunpack.c.l.b16 %v1110
      %v1303 = vunpack.c.l.b16 %v1111
      %v1304 = vunpack.c.h.b16 %v1111
      %v1305 = vunpack.c.l.b16 %v1112
      %v1306 = vunpack.c.h.b16 %v1112
      %v1307 = vunpack.c.l.b16 %v1113
      %v1308 = vunpack.c.h.b16 %v1113
      %v1309 = vunpack.c.l.b16 %v1114
      %v1310 = vunpack.c.l.b16 %v1115
      %v1311 = vunpack.c.h.b16 %v1115
      %v1312 = vunpack.c.l.b16 %v1116
      %v1313 = vunpack.c.h.b16 %v1116
      %v1314 = vunpack.c.l.b16 %v1117
      %v1315 = vunpack.c.h.b16 %v1117
      %v1316 = vunpack.c.l.b16 %v1118
      %v1317 = vunpack.c.l.b16 %v1119
      %v1318 = vunpack.c.h.b16 %v1119
      %v1319 = vunpack.c.l.b16 %v1120
      %v1320 = vunpack.c.h.b16 %v1120
      %v1321 = vunpack.c.l.b16 %v1121
      %v1322 = vunpack.c.h.b16 %v1121
      %v1323 = vunpack.c.l.b16 %v1122
      %v1324 = vunpack.c.l.b16 %v1123
      %v1325 = vunpack.c.h.b16 %v1123
      %v1326 = vunpack.c.l.b16 %v1124
      %v1327 = vunpack.c.h.b16 %v1124
      %v1328 = vunpack.c.l.b16 %v1125
      %v1329 = vunpack.c.h.b16 %v1125
      %v1330 = vunpack.c.l.b16 %v1126
      %v1331 = vunpack.c.l.b16 %v1127
      %v1332 = vunpack.c.h.b16 %v1127
      %v1333 = vunpack.c.l.b16 %v1128
      %v1334 = vunpack.c.h.b16 %v1128
      %v1335 = vunpack.c.l.b16 %v1129
      %v1336 = vunpack.c.h.b16 %v1129
      %v1337 = vunpack.c.l.b16 %v1130
      %v1338 = vunpack.c.l.b16 %v1131
      %v1339 = vunpack.c.h.b16 %v1131
      %v1340 = vunpack.c.l.b16 %v1132
      %v1341 = vunpack.c.h.b16 %v1132
      %v1342 = vunpack.c.l.b16 %v1133
      %v1343 = vunpack.c.h.b16 %v1133
      %v1344 = vunpack.c.l.b16 %v1134
      %v1345 = vunpack.c.l.b16 %v1135
      %v1346 = vunpack.c.h.b16 %v1135
      %v1347 = vunpack.c.l.b16 %v1136
      %v1348 = vunpack.c.h.b16 %v1136
      %v1349 = vunpack.c.l.b16 %v1137
      %v1350 = vunpack.c.h.b16 %v1137
      %v1351 = vunpack.c.l.b16 %v1138
      %v1352 = vpack.c.b16 %v1247, %v1240
      %v1353 = vpack.c.b16 %v1248, %v1241
      %v1354 = vpack.c.b16 %v1249, %v1242
      %v1355 = vpack.c.b16 %v1250, %v1243
      %v1356 = vpack.c.b16 %v1251, %v1244
      %v1357 = vpack.c.b16 %v1252, %v1245
      %v1358 = vpack.c.b16 %v1253, %v1246
      %v1359 = vpack.c.b16 %v1261, %v1254
      %v1360 = vpack.c.b16 %v1262, %v1255
      %v1361 = vpack.c.b16 %v1263, %v1256
      %v1362 = vpack.c.b16 %v1264, %v1257
      %v1363 = vpack.c.b16 %v1265, %v1258
      %v1364 = vpack.c.b16 %v1266, %v1259
      %v1365 = vpack.c.b16 %v1267, %v1260
      %v1366 = vpack.c.b16 %v1275, %v1268
      %v1367 = vpack.c.b16 %v1276, %v1269
      %v1368 = vpack.c.b16 %v1277, %v1270
      %v1369 = vpack.c.b16 %v1278, %v1271
      %v1370 = vpack.c.b16 %v1279, %v1272
      %v1371 = vpack.c.b16 %v1280, %v1273
      %v1372 = vpack.c.b16 %v1281, %v1274
      %v1373 = vpack.c.b16 %v1289, %v1282
      %v1374 = vpack.c.b16 %v1290, %v1283
      %v1375 = vpack.c.b16 %v1291, %v1284
      %v1376 = vpack.c.b16 %v1292, %v1285
      %v1377 = vpack.c.b16 %v1293, %v1286
      %v1378 = vpack.c.b16 %v1294, %v1287
      %v1379 = vpack.c.b16 %v1295, %v1288
      %v1380 = vpack.c.b16 %v1303, %v1296
      %v1381 = vpack.c.b16 %v1304, %v1297
      %v1382 = vpack.c.b16 %v1305, %v1298
      %v1383 = vpack.c.b16 %v1306, %v1299
      %v1384 = vpack.c.b16 %v1307, %v1300
      %v1385 = vpack.c.b16 %v1308, %v1301
      %v1386 = vpack.c.b16 %v1309, %v1302
      %v1387 = vpack.c.b16 %v1317, %v1310
      %v1388 = vpack.c.b16 %v1318, %v1311
      %v1389 = vpack.c.b16 %v1319, %v1312
      %v1390 = vpack.c.b16 %v1320, %v1313
      %v1391 = vpack.c.b16 %v1321, %v1314
      %v1392 = vpack.c.b16 %v1322, %v1315
      %v1393 = vpack.c.b16 %v1323, %v1316
      %v1394 = vpack.c.b16 %v1331, %v1324
      %v1395 = vpack.c.b16 %v1332, %v1325
      %v1396 = vpack.c.b16 %v1333, %v1326
      %v1397 = vpack.c.b16 %v1334, %v1327
      %v1398 = vpack.c.b16 %v1335, %v1328
      %v1399 = vpack.c.b16 %v1336, %v1329
      %v1400 = vpack.c.b16 %v1337, %v1330
      %v1401 = vpack.c.b16 %v1345, %v1338
      %v1402 = vpack.c.b16 %v1346, %v1339
      %v1403 = vpack.c.b16 %v1347, %v1340
      %v1404 = vpack.c.b16 %v1348, %v1341
      %v1405 = vpack.c.b16 %v1349, %v1342
      %v1406 = vpack.c.b16 %v1350, %v1343
      %v1407 = vpack.c.b16 %v1351, %v1344
      %1464 = vmatprep.subr.bf16.mxu0 %v1353
      %1465 = vmatpush1.bf16.msra.mxu0 %v1352
      %1466 = vmatprep.subr.bf16.mxu0 %v1360
      %1467 = vmatpush1.bf16.msra.mxu0 %v1359
      %1468 = vmatprep.subr.bf16.mxu0 %v1367
      %1469 = vmatpush1.bf16.msra.mxu0 %v1366
      %1470 = vmatprep.subr.bf16.mxu0 %v1374
      %1471 = vmatpush1.bf16.msra.mxu0 %v1373
      %1472 = vmatprep.subr.bf16.mxu0 %v1381
      %1473 = vmatpush1.bf16.msra.mxu0 %v1380
      %1474 = vmatprep.subr.bf16.mxu0 %v1388
      %1475 = vmatpush1.bf16.msra.mxu0 %v1387
      %1476 = vmatprep.subr.bf16.mxu0 %v1395
      %1477 = vmatpush1.bf16.msra.mxu0 %v1394
      %1478 = vmatprep.subr.bf16.mxu0 %v1402
      %1479 = vmatpush1.bf16.msra.mxu0 %v1401
      %1480 = vmatprep.subr.bf16.mxu0 0
      %1481 = vmatpush1.bf16.msra.mxu0 0
      %1482 = vmatprep.subr.bf16.mxu0 0
      %1483 = vmatpush1.bf16.msra.mxu0 0
      %1484 = vmatprep.subr.bf16.mxu0 0
      %1485 = vmatpush1.bf16.msra.mxu0 0
      %1486 = vmatprep.subr.bf16.mxu0 0
      %1487 = vmatpush1.bf16.msra.mxu0 0
      %1488 = vmatprep.subr.bf16.mxu0 0
      %1489 = vmatpush1.bf16.msra.mxu0 0
      %1490 = vmatprep.subr.bf16.mxu0 0
      %1491 = vmatpush1.bf16.msra.mxu0 0
      %1492 = vmatprep.subr.bf16.mxu0 0
      %1493 = vmatpush1.bf16.msra.mxu0 0
      %1494 = vmatprep.subr.bf16.mxu0 0
      %1495 = vmatpush1.bf16.msra.mxu0 0
      %1496 = vmatprep.mubr.bf16.mxu0 0
      %1497 = vmatmul.mubr.bf16.gmra.mrb[0].mxu0 %v1067
      %v1498 = vpop.f32.mrb[0].mxu0
      %v1499 = vadd.f32 %v1144, %v1498
      %v1500 = vpop.f32.mrb[0].mxu0
      %v1501 = vadd.f32 %v1148, %v1500
      %v1502 = vpop.f32.mrb[0].mxu0
      %v1503 = vadd.f32 %v1144, %v1502
      %v1504 = vpop.f32.mrb[0].mxu0
      %v1505 = vadd.f32 %v1148, %v1504
      %1506 = vmatprep.mubr.bf16.mxu0 0
      %1507 = vmatmul.mubr.bf16.gmra.mrb[0].mxu0 %v1068
      %v1508 = vpop.f32.mrb[0].mxu0
      %v1509 = vadd.f32 %v1144, %v1508
      %v1510 = vpop.f32.mrb[0].mxu0
      %v1511 = vadd.f32 %v1148, %v1510
      %v1512 = vpop.f32.mrb[0].mxu0
      %v1513 = vadd.f32 %v1144, %v1512
      %v1514 = vpop.f32.mrb[0].mxu0
      %v1515 = vadd.f32 %v1148, %v1514
      %1516 = vmatprep.mubr.bf16.mxu0 0
      %1517 = vmatmul.mubr.bf16.gmra.mrb[0].mxu0 %v1069
      %v1518 = vpop.f32.mrb[0].mxu0
      %v1519 = vadd.f32 %v1144, %v1518
      %v1520 = vpop.f32.mrb[0].mxu0
      %v1521 = vadd.f32 %v1148, %v1520
      %v1522 = vpop.f32.mrb[0].mxu0
      %v1523 = vadd.f32 %v1144, %v1522
      %v1524 = vpop.f32.mrb[0].mxu0
      %v1525 = vadd.f32 %v1148, %v1524
      %1526 = vmatprep.mubr.bf16.mxu0 0
      %1527 = vmatmul.mubr.bf16.gmra.mrb[0].mxu0 %v1070
      %v1528 = vpop.f32.mrb[0].mxu0
      %v1529 = vadd.f32 %v1144, %v1528
      %v1530 = vpop.f32.mrb[0].mxu0
      %v1531 = vadd.f32 %v1148, %v1530
      %v1532 = vpop.f32.mrb[0].mxu0
      %v1533 = vadd.f32 %v1144, %v1532
      %v1534 = vpop.f32.mrb[0].mxu0
      %v1535 = vadd.f32 %v1148, %v1534
      %1536 = vmatprep.mubr.bf16.mxu0 0
      %1537 = vmatmul.mubr.bf16.gmra.mrb[0].mxu0 %v1071
      %v1538 = vpop.f32.mrb[0].mxu0
      %v1539 = vadd.f32 %v1144, %v1538
      %v1540 = vpop.f32.mrb[0].mxu0
      %v1541 = vadd.f32 %v1148, %v1540
      %v1542 = vpop.f32.mrb[0].mxu0
      %v1543 = vadd.f32 %v1144, %v1542
      %v1544 = vpop.f32.mrb[0].mxu0
      %v1545 = vadd.f32 %v1148, %v1544
      %1546 = vmatprep.mubr.bf16.mxu0 0
      %1547 = vmatmul.mubr.bf16.gmra.mrb[0].mxu0 %v1072
      %v1548 = vpop.f32.mrb[0].mxu0
      %v1549 = vadd.f32 %v1144, %v1548
      %v1550 = vpop.f32.mrb[0].mxu0
      %v1551 = vadd.f32 %v1148, %v1550
      %v1552 = vpop.f32.mrb[0].mxu0
      %v1553 = vadd.f32 %v1144, %v1552
      %v1554 = vpop.f32.mrb[0].mxu0
      %v1555 = vadd.f32 %v1148, %v1554
      %1556 = vmatprep.mubr.bf16.mxu0 0
      %1557 = vmatmul.mubr.bf16.gmra.mrb[0].mxu0 %v1073
      %v1558 = vpop.f32.mrb[0].mxu0
      %v1559 = vadd.f32 %v1144, %v1558
      %v1560 = vpop.f32.mrb[0].mxu0
      %v1561 = vadd.f32 %v1148, %v1560
      %v1562 = vpop.f32.mrb[0].mxu0
      %v1563 = vadd.f32 %v1144, %v1562
      %v1564 = vpop.f32.mrb[0].mxu0
      %v1565 = vadd.f32 %v1148, %v1564
      %1566 = vmatprep.mubr.bf16.mxu0 0
      %1567 = vmatmul.mubr.bf16.gmra.mrb[0].mxu0 %v1074
      %v1568 = vpop.f32.mrb[0].mxu0
      %v1569 = vadd.f32 %v1144, %v1568
      %v1570 = vpop.f32.mrb[0].mxu0
      %v1571 = vadd.f32 %v1148, %v1570
      %v1572 = vpop.f32.mrb[0].mxu0
      %v1573 = vadd.f32 %v1144, %v1572
      %v1574 = vpop.f32.mrb[0].mxu0
      %v1575 = vadd.f32 %v1148, %v1574
      %1576 = vdwg.mxu0
      %1577 = vmatprep.subr.bf16.mxu0 %v1355
      %1578 = vmatpush1.bf16.msra.mxu0 %v1354
      %1579 = vmatprep.subr.bf16.mxu0 %v1362
      %1580 = vmatpush1.bf16.msra.mxu0 %v1361
      %1581 = vmatprep.subr.bf16.mxu0 %v1369
      %1582 = vmatpush1.bf16.msra.mxu0 %v1368
      %1583 = vmatprep.subr.bf16.mxu0 %v1376
      %1584 = vmatpush1.bf16.msra.mxu0 %v1375
      %1585 = vmatprep.subr.bf16.mxu0 %v1383
      %1586 = vmatpush1.bf16.msra.mxu0 %v1382
      %1587 = vmatprep.subr.bf16.mxu0 %v1390
      %1588 = vmatpush1.bf16.msra.mxu0 %v1389
      %1589 = vmatprep.subr.bf16.mxu0 %v1397
      %1590 = vmatpush1.bf16.msra.mxu0 %v1396
      %1591 = vmatprep.subr.bf16.mxu0 %v1404
      %1592 = vmatpush1.bf16.msra.mxu0 %v1403
      %1593 = vmatprep.subr.bf16.mxu0 0
      %1594 = vmatpush1.bf16.msra.mxu0 0
      %1595 = vmatprep.subr.bf16.mxu0 0
      %1596 = vmatpush1.bf16.msra.mxu0 0
      %1597 = vmatprep.subr.bf16.mxu0 0
      %1598 = vmatpush1.bf16.msra.mxu0 0
      %1599 = vmatprep.subr.bf16.mxu0 0
      %1600 = vmatpush1.bf16.msra.mxu0 0
      %1601 = vmatprep.subr.bf16.mxu0 0
      %1602 = vmatpush1.bf16.msra.mxu0 0
      %1603 = vmatprep.subr.bf16.mxu0 0
      %1604 = vmatpush1.bf16.msra.mxu0 0
      %1605 = vmatprep.subr.bf16.mxu0 0
      %1606 = vmatpush1.bf16.msra.mxu0 0
      %1607 = vmatprep.subr.bf16.mxu0 0
      %1608 = vmatpush1.bf16.msra.mxu0 0
      %1609 = vmatprep.mubr.bf16.mxu0 0
      %1610 = vmatmul.mubr.bf16.gmra.mrb[0].mxu0 %v1067
      %v1611 = vpop.f32.mrb[0].mxu0
      %v1612 = vadd.f32 %v1152, %v1611
      %v1613 = vpop.f32.mrb[0].mxu0
      %v1614 = vadd.f32 %v1156, %v1613
      %v1615 = vpop.f32.mrb[0].mxu0
      %v1616 = vadd.f32 %v1152, %v1615
      %v1617 = vpop.f32.mrb[0].mxu0
      %v1618 = vadd.f32 %v1156, %v1617
      %1619 = vmatprep.mubr.bf16.mxu0 0
      %1620 = vmatmul.mubr.bf16.gmra.mrb[0].mxu0 %v1068
      %v1621 = vpop.f32.mrb[0].mxu0
      %v1622 = vadd.f32 %v1152, %v1621
      %v1623 = vpop.f32.mrb[0].mxu0
      %v1624 = vadd.f32 %v1156, %v1623
      %v1625 = vpop.f32.mrb[0].mxu0
      %v1626 = vadd.f32 %v1152, %v1625
      %v1627 = vpop.f32.mrb[0].mxu0
      %v1628 = vadd.f32 %v1156, %v1627
      %1629 = vmatprep.mubr.bf16.mxu0 0
      %1630 = vmatmul.mubr.bf16.gmra.mrb[0].mxu0 %v1069
      %v1631 = vpop.f32.mrb[0].mxu0
      %v1632 = vadd.f32 %v1152, %v1631
      %v1633 = vpop.f32.mrb[0].mxu0
      %v1634 = vadd.f32 %v1156, %v1633
      %v1635 = vpop.f32.mrb[0].mxu0
      %v1636 = vadd.f32 %v1152, %v1635
      %v1637 = vpop.f32.mrb[0].mxu0
      %v1638 = vadd.f32 %v1156, %v1637
      %1639 = vmatprep.mubr.bf16.mxu0 0
      %1640 = vmatmul.mubr.bf16.gmra.mrb[0].mxu0 %v1070
      %v1641 = vpop.f32.mrb[0].mxu0
      %v1642 = vadd.f32 %v1152, %v1641
      %v1643 = vpop.f32.mrb[0].mxu0
      %v1644 = vadd.f32 %v1156, %v1643
      %v1645 = vpop.f32.mrb[0].mxu0
      %v1646 = vadd.f32 %v1152, %v1645
      %v1647 = vpop.f32.mrb[0].mxu0
      %v1648 = vadd.f32 %v1156, %v1647
      %1649 = vmatprep.mubr.bf16.mxu0 0
      %1650 = vmatmul.mubr.bf16.gmra.mrb[0].mxu0 %v1071
      %v1651 = vpop.f32.mrb[0].mxu0
      %v1652 = vadd.f32 %v1152, %v1651
      %v1653 = vpop.f32.mrb[0].mxu0
      %v1654 = vadd.f32 %v1156, %v1653
      %v1655 = vpop.f32.mrb[0].mxu0
      %v1656 = vadd.f32 %v1152, %v1655
      %v1657 = vpop.f32.mrb[0].mxu0
      %v1658 = vadd.f32 %v1156, %v1657
      %1659 = vmatprep.mubr.bf16.mxu0 0
      %1660 = vmatmul.mubr.bf16.gmra.mrb[0].mxu0 %v1072
      %v1661 = vpop.f32.mrb[0].mxu0
      %v1662 = vadd.f32 %v1152, %v1661
      %v1663 = vpop.f32.mrb[0].mxu0
      %v1664 = vadd.f32 %v1156, %v1663
      %v1665 = vpop.f32.mrb[0].mxu0
      %v1666 = vadd.f32 %v1152, %v1665
      %v1667 = vpop.f32.mrb[0].mxu0
      %v1668 = vadd.f32 %v1156, %v1667
      %1669 = vmatprep.mubr.bf16.mxu0 0
      %1670 = vmatmul.mubr.bf16.gmra.mrb[0].mxu0 %v1073
      %v1671 = vpop.f32.mrb[0].mxu0
      %v1672 = vadd.f32 %v1152, %v1671
      %v1673 = vpop.f32.mrb[0].mxu0
      %v1674 = vadd.f32 %v1156, %v1673
      %v1675 = vpop.f32.mrb[0].mxu0
      %v1676 = vadd.f32 %v1152, %v1675
      %v1677 = vpop.f32.mrb[0].mxu0
      %v1678 = vadd.f32 %v1156, %v1677
      %1679 = vmatprep.mubr.bf16.mxu0 0
      %1680 = vmatmul.mubr.bf16.gmra.mrb[0].mxu0 %v1074
      %v1681 = vpop.f32.mrb[0].mxu0
      %v1682 = vadd.f32 %v1152, %v1681
      %v1683 = vpop.f32.mrb[0].mxu0
      %v1684 = vadd.f32 %v1156, %v1683
      %v1685 = vpop.f32.mrb[0].mxu0
      %v1686 = vadd.f32 %v1152, %v1685
      %v1687 = vpop.f32.mrb[0].mxu0
      %v1688 = vadd.f32 %v1156, %v1687
      %1689 = vdwg.mxu0
      %1690 = vmatprep.subr.bf16.mxu0 %v1357
      %1691 = vmatpush1.bf16.msra.mxu0 %v1356
      %1692 = vmatprep.subr.bf16.mxu0 %v1364
      %1693 = vmatpush1.bf16.msra.mxu0 %v1363
      %1694 = vmatprep.subr.bf16.mxu0 %v1371
      %1695 = vmatpush1.bf16.msra.mxu0 %v1370
      %1696 = vmatprep.subr.bf16.mxu0 %v1378
      %1697 = vmatpush1.bf16.msra.mxu0 %v1377
      %1698 = vmatprep.subr.bf16.mxu0 %v1385
      %1699 = vmatpush1.bf16.msra.mxu0 %v1384
      %1700 = vmatprep.subr.bf16.mxu0 %v1392
      %1701 = vmatpush1.bf16.msra.mxu0 %v1391
      %1702 = vmatprep.subr.bf16.mxu0 %v1399
      %1703 = vmatpush1.bf16.msra.mxu0 %v1398
      %1704 = vmatprep.subr.bf16.mxu0 %v1406
      %1705 = vmatpush1.bf16.msra.mxu0 %v1405
      %1706 = vmatprep.subr.bf16.mxu0 0
      %1707 = vmatpush1.bf16.msra.mxu0 0
      %1708 = vmatprep.subr.bf16.mxu0 0
      %1709 = vmatpush1.bf16.msra.mxu0 0
      %1710 = vmatprep.subr.bf16.mxu0 0
      %1711 = vmatpush1.bf16.msra.mxu0 0
      %1712 = vmatprep.subr.bf16.mxu0 0
      %1713 = vmatpush1.bf16.msra.mxu0 0
      %1714 = vmatprep.subr.bf16.mxu0 0
      %1715 = vmatpush1.bf16.msra.mxu0 0
      %1716 = vmatprep.subr.bf16.mxu0 0
      %1717 = vmatpush1.bf16.msra.mxu0 0
      %1718 = vmatprep.subr.bf16.mxu0 0
      %1719 = vmatpush1.bf16.msra.mxu0 0
      %1720 = vmatprep.subr.bf16.mxu0 0
      %1721 = vmatpush1.bf16.msra.mxu0 0
      %1722 = vmatprep.mubr.bf16.mxu0 0
      %1723 = vmatmul.mubr.bf16.gmra.mrb[0].mxu0 %v1067
      %v1724 = vpop.f32.mrb[0].mxu0
      %v1725 = vadd.f32 %v1160, %v1724
      %v1726 = vpop.f32.mrb[0].mxu0
      %v1727 = vadd.f32 %v1164, %v1726
      %v1728 = vpop.f32.mrb[0].mxu0
      %v1729 = vadd.f32 %v1160, %v1728
      %v1730 = vpop.f32.mrb[0].mxu0
      %v1731 = vadd.f32 %v1164, %v1730
      %1732 = vmatprep.mubr.bf16.mxu0 0
      %1733 = vmatmul.mubr.bf16.gmra.mrb[0].mxu0 %v1068
      %v1734 = vpop.f32.mrb[0].mxu0
      %v1735 = vadd.f32 %v1160, %v1734
      %v1736 = vpop.f32.mrb[0].mxu0
      %v1737 = vadd.f32 %v1164, %v1736
      %v1738 = vpop.f32.mrb[0].mxu0
      %v1739 = vadd.f32 %v1160, %v1738
      %v1740 = vpop.f32.mrb[0].mxu0
      %v1741 = vadd.f32 %v1164, %v1740
      %1742 = vmatprep.mubr.bf16.mxu0 0
      %1743 = vmatmul.mubr.bf16.gmra.mrb[0].mxu0 %v1069
      %v1744 = vpop.f32.mrb[0].mxu0
      %v1745 = vadd.f32 %v1160, %v1744
      %v1746 = vpop.f32.mrb[0].mxu0
      %v1747 = vadd.f32 %v1164, %v1746
      %v1748 = vpop.f32.mrb[0].mxu0
      %v1749 = vadd.f32 %v1160, %v1748
      %v1750 = vpop.f32.mrb[0].mxu0
      %v1751 = vadd.f32 %v1164, %v1750
      %1752 = vmatprep.mubr.bf16.mxu0 0
      %1753 = vmatmul.mubr.bf16.gmra.mrb[0].mxu0 %v1070
      %v1754 = vpop.f32.mrb[0].mxu0
      %v1755 = vadd.f32 %v1160, %v1754
      %v1756 = vpop.f32.mrb[0].mxu0
      %v1757 = vadd.f32 %v1164, %v1756
      %v1758 = vpop.f32.mrb[0].mxu0
      %v1759 = vadd.f32 %v1160, %v1758
      %v1760 = vpop.f32.mrb[0].mxu0
      %v1761 = vadd.f32 %v1164, %v1760
      %1762 = vmatprep.mubr.bf16.mxu0 0
      %1763 = vmatmul.mubr.bf16.gmra.mrb[0].mxu0 %v1071
      %v1764 = vpop.f32.mrb[0].mxu0
      %v1765 = vadd.f32 %v1160, %v1764
      %v1766 = vpop.f32.mrb[0].mxu0
      %v1767 = vadd.f32 %v1164, %v1766
      %v1768 = vpop.f32.mrb[0].mxu0
      %v1769 = vadd.f32 %v1160, %v1768
      %v1770 = vpop.f32.mrb[0].mxu0
      %v1771 = vadd.f32 %v1164, %v1770
      %1772 = vmatprep.mubr.bf16.mxu0 0
      %1773 = vmatmul.mubr.bf16.gmra.mrb[0].mxu0 %v1072
      %v1774 = vpop.f32.mrb[0].mxu0
      %v1775 = vadd.f32 %v1160, %v1774
      %v1776 = vpop.f32.mrb[0].mxu0
      %v1777 = vadd.f32 %v1164, %v1776
      %v1778 = vpop.f32.mrb[0].mxu0
      %v1779 = vadd.f32 %v1160, %v1778
      %v1780 = vpop.f32.mrb[0].mxu0
      %v1781 = vadd.f32 %v1164, %v1780
      %1782 = vmatprep.mubr.bf16.mxu0 0
      %1783 = vmatmul.mubr.bf16.gmra.mrb[0].mxu0 %v1073
      %v1784 = vpop.f32.mrb[0].mxu0
      %v1785 = vadd.f32 %v1160, %v1784
      %v1786 = vpop.f32.mrb[0].mxu0
      %v1787 = vadd.f32 %v1164, %v1786
      %v1788 = vpop.f32.mrb[0].mxu0
      %v1789 = vadd.f32 %v1160, %v1788
      %v1790 = vpop.f32.mrb[0].mxu0
      %v1791 = vadd.f32 %v1164, %v1790
      %1792 = vmatprep.mubr.bf16.mxu0 0
      %1793 = vmatmul.mubr.bf16.gmra.mrb[0].mxu0 %v1074
      %v1794 = vpop.f32.mrb[0].mxu0
      %v1795 = vadd.f32 %v1160, %v1794
      %v1796 = vpop.f32.mrb[0].mxu0
      %v1797 = vadd.f32 %v1164, %v1796
      %v1798 = vpop.f32.mrb[0].mxu0
      %v1799 = vadd.f32 %v1160, %v1798
      %v1800 = vpop.f32.mrb[0].mxu0
      %v1801 = vadd.f32 %v1164, %v1800
      %1802 = vdwg.mxu0
      %1803 = vmatprep.subr.bf16.mxu0 0
      %1804 = vmatpush1.bf16.msra.mxu0 %v1358
      %1805 = vmatprep.subr.bf16.mxu0 0
      %1806 = vmatpush1.bf16.msra.mxu0 %v1365
      %1807 = vmatprep.subr.bf16.mxu0 0
      %1808 = vmatpush1.bf16.msra.mxu0 %v1372
      %1809 = vmatprep.subr.bf16.mxu0 0
      %1810 = vmatpush1.bf16.msra.mxu0 %v1379
      %1811 = vmatprep.subr.bf16.mxu0 0
      %1812 = vmatpush1.bf16.msra.mxu0 %v1386
      %1813 = vmatprep.subr.bf16.mxu0 0
      %1814 = vmatpush1.bf16.msra.mxu0 %v1393
      %1815 = vmatprep.subr.bf16.mxu0 0
      %1816 = vmatpush1.bf16.msra.mxu0 %v1400
      %1817 = vmatprep.subr.bf16.mxu0 0
      %1818 = vmatpush1.bf16.msra.mxu0 %v1407
      %1819 = vmatprep.subr.bf16.mxu0 0
      %1820 = vmatpush1.bf16.msra.mxu0 0
      %1821 = vmatprep.subr.bf16.mxu0 0
      %1822 = vmatpush1.bf16.msra.mxu0 0
      %1823 = vmatprep.subr.bf16.mxu0 0
      %1824 = vmatpush1.bf16.msra.mxu0 0
      %1825 = vmatprep.subr.bf16.mxu0 0
      %1826 = vmatpush1.bf16.msra.mxu0 0
      %1827 = vmatprep.subr.bf16.mxu0 0
      %1828 = vmatpush1.bf16.msra.mxu0 0
      %1829 = vmatprep.subr.bf16.mxu0 0
      %1830 = vmatpush1.bf16.msra.mxu0 0
      %1831 = vmatprep.subr.bf16.mxu0 0
      %1832 = vmatpush1.bf16.msra.mxu0 0
      %1833 = vmatprep.subr.bf16.mxu0 0
      %1834 = vmatpush1.bf16.msra.mxu0 0
      %1835 = vmatprep.mubr.bf16.mxu0 0
      %1836 = vmatmul.mubr.bf16.gmra.mrb[0].mxu0 %v1067
      %v1837 = vpop.f32.mrb[0].mxu0
      %v1838 = vadd.f32 %v1168, %v1837
      %v1839 = vpop.f32.mrb[0].mxu0
      %v1840 = vpop.f32.mrb[0].mxu0
      %v1841 = vadd.f32 %v1168, %v1840
      %v1842 = vpop.f32.mrb[0].mxu0
      %1843 = vmatprep.mubr.bf16.mxu0 0
      %1844 = vmatmul.mubr.bf16.gmra.mrb[0].mxu0 %v1068
      %v1845 = vpop.f32.mrb[0].mxu0
      %v1846 = vadd.f32 %v1168, %v1845
      %v1847 = vpop.f32.mrb[0].mxu0
      %v1848 = vpop.f32.mrb[0].mxu0
      %v1849 = vadd.f32 %v1168, %v1848
      %v1850 = vpop.f32.mrb[0].mxu0
      %1851 = vmatprep.mubr.bf16.mxu0 0
      %1852 = vmatmul.mubr.bf16.gmra.mrb[0].mxu0 %v1069
      %v1853 = vpop.f32.mrb[0].mxu0
      %v1854 = vadd.f32 %v1168, %v1853
      %v1855 = vpop.f32.mrb[0].mxu0
      %v1856 = vpop.f32.mrb[0].mxu0
      %v1857 = vadd.f32 %v1168, %v1856
      %v1858 = vpop.f32.mrb[0].mxu0
      %1859 = vmatprep.mubr.bf16.mxu0 0
      %1860 = vmatmul.mubr.bf16.gmra.mrb[0].mxu0 %v1070
      %v1861 = vpop.f32.mrb[0].mxu0
      %v1862 = vadd.f32 %v1168, %v1861
      %v1863 = vpop.f32.mrb[0].mxu0
      %v1864 = vpop.f32.mrb[0].mxu0
      %v1865 = vadd.f32 %v1168, %v1864
      %v1866 = vpop.f32.mrb[0].mxu0
      %1867 = vmatprep.mubr.bf16.mxu0 0
      %1868 = vmatmul.mubr.bf16.gmra.mrb[0].mxu0 %v1071
      %v1869 = vpop.f32.mrb[0].mxu0
      %v1870 = vadd.f32 %v1168, %v1869
      %v1871 = vpop.f32.mrb[0].mxu0
      %v1872 = vpop.f32.mrb[0].mxu0
      %v1873 = vadd.f32 %v1168, %v1872
      %v1874 = vpop.f32.mrb[0].mxu0
      %1875 = vmatprep.mubr.bf16.mxu0 0
      %1876 = vmatmul.mubr.bf16.gmra.mrb[0].mxu0 %v1072
      %v1877 = vpop.f32.mrb[0].mxu0
      %v1878 = vadd.f32 %v1168, %v1877
      %v1879 = vpop.f32.mrb[0].mxu0
      %v1880 = vpop.f32.mrb[0].mxu0
      %v1881 = vadd.f32 %v1168, %v1880
      %v1882 = vpop.f32.mrb[0].mxu0
      %1883 = vmatprep.mubr.bf16.mxu0 0
      %1884 = vmatmul.mubr.bf16.gmra.mrb[0].mxu0 %v1073
      %v1885 = vpop.f32.mrb[0].mxu0
      %v1886 = vadd.f32 %v1168, %v1885
      %v1887 = vpop.f32.mrb[0].mxu0
      %v1888 = vpop.f32.mrb[0].mxu0
      %v1889 = vadd.f32 %v1168, %v1888
      %v1890 = vpop.f32.mrb[0].mxu0
      %1891 = vmatprep.mubr.bf16.mxu0 0
      %1892 = vmatmul.mubr.bf16.gmra.mrb[0].mxu0 %v1074
      %v1893 = vpop.f32.mrb[0].mxu0
      %v1894 = vadd.f32 %v1168, %v1893
      %v1895 = vpop.f32.mrb[0].mxu0
      %v1896 = vpop.f32.mrb[0].mxu0
      %v1897 = vadd.f32 %v1168, %v1896
      %v1898 = vpop.f32.mrb[0].mxu0
      %1899 = vdwg.mxu0
      %v1900 = vtanh.pop %v1499
      %v1901 = vtanh.pop %v1501
      %v1902 = vtanh.pop %v1612
      %v1903 = vtanh.pop %v1614
      %v1904 = vtanh.pop %v1725
      %v1905 = vtanh.pop %v1727
      %v1906 = vtanh.pop %v1838
      %v1907 = vtanh.pop %v1503
      %v1908 = vtanh.pop %v1505
      %v1909 = vtanh.pop %v1616
      %v1910 = vtanh.pop %v1618
      %v1911 = vtanh.pop %v1729
      %v1912 = vtanh.pop %v1731
      %v1913 = vtanh.pop %v1841
      %v1914 = vtanh.pop %v1509
      %v1915 = vtanh.pop %v1511
      %v1916 = vtanh.pop %v1622
      %v1917 = vtanh.pop %v1624
      %v1918 = vtanh.pop %v1735
      %v1919 = vtanh.pop %v1737
      %v1920 = vtanh.pop %v1846
      %v1921 = vtanh.pop %v1513
      %v1922 = vtanh.pop %v1515
      %v1923 = vtanh.pop %v1626
      %v1924 = vtanh.pop %v1628
      %v1925 = vtanh.pop %v1739
      %v1926 = vtanh.pop %v1741
      %v1927 = vtanh.pop %v1849
      %v1928 = vtanh.pop %v1519
      %v1929 = vtanh.pop %v1521
      %v1930 = vtanh.pop %v1632
      %v1931 = vtanh.pop %v1634
      %v1932 = vtanh.pop %v1745
      %v1933 = vtanh.pop %v1747
      %v1934 = vtanh.pop %v1854
      %v1935 = vtanh.pop %v1523
      %v1936 = vtanh.pop %v1525
      %v1937 = vtanh.pop %v1636
      %v1938 = vtanh.pop %v1638
      %v1939 = vtanh.pop %v1749
      %v1940 = vtanh.pop %v1751
      %v1941 = vtanh.pop %v1857
      %v1942 = vtanh.pop %v1529
      %v1943 = vtanh.pop %v1531
      %v1944 = vtanh.pop %v1642
      %v1945 = vtanh.pop %v1644
      %v1946 = vtanh.pop %v1755
      %v1947 = vtanh.pop %v1757
      %v1948 = vtanh.pop %v1862
      %v1949 = vtanh.pop %v1533
      %v1950 = vtanh.pop %v1535
      %v1951 = vtanh.pop %v1646
      %v1952 = vtanh.pop %v1648
      %v1953 = vtanh.pop %v1759
      %v1954 = vtanh.pop %v1761
      %v1955 = vtanh.pop %v1865
      %v1956 = vtanh.pop %v1539
      %v1957 = vtanh.pop %v1541
      %v1958 = vtanh.pop %v1652
      %v1959 = vtanh.pop %v1654
      %v1960 = vtanh.pop %v1765
      %v1961 = vtanh.pop %v1767
      %v1962 = vtanh.pop %v1870
      %v1963 = vtanh.pop %v1543
      %v1964 = vtanh.pop %v1545
      %v1965 = vtanh.pop %v1656
      %v1966 = vtanh.pop %v1658
      %v1967 = vtanh.pop %v1769
      %v1968 = vtanh.pop %v1771
      %v1969 = vtanh.pop %v1873
      %v1970 = vtanh.pop %v1549
      %v1971 = vtanh.pop %v1551
      %v1972 = vtanh.pop %v1662
      %v1973 = vtanh.pop %v1664
      %v1974 = vtanh.pop %v1775
      %v1975 = vtanh.pop %v1777
      %v1976 = vtanh.pop %v1878
      %v1977 = vtanh.pop %v1553
      %v1978 = vtanh.pop %v1555
      %v1979 = vtanh.pop %v1666
      %v1980 = vtanh.pop %v1668
      %v1981 = vtanh.pop %v1779
      %v1982 = vtanh.pop %v1781
      %v1983 = vtanh.pop %v1881
      %v1984 = vtanh.pop %v1559
      %v1985 = vtanh.pop %v1561
      %v1986 = vtanh.pop %v1672
      %v1987 = vtanh.pop %v1674
      %v1988 = vtanh.pop %v1785
      %v1989 = vtanh.pop %v1787
      %v1990 = vtanh.pop %v1886
      %v1991 = vtanh.pop %v1563
      %v1992 = vtanh.pop %v1565
      %v1993 = vtanh.pop %v1676
      %v1994 = vtanh.pop %v1678
      %v1995 = vtanh.pop %v1789
      %v1996 = vtanh.pop %v1791
      %v1997 = vtanh.pop %v1889
      %v1998 = vtanh.pop %v1569
      %v1999 = vtanh.pop %v1571
      %v2000 = vtanh.pop %v1682
      %v2001 = vtanh.pop %v1684
      %v2002 = vtanh.pop %v1795
      %v2003 = vtanh.pop %v1797
      %v2004 = vtanh.pop %v1894
      %v2005 = vtanh.pop %v1573
      %v2006 = vtanh.pop %v1575
      %v2007 = vtanh.pop %v1686
      %v2008 = vtanh.pop %v1688
      %v2009 = vtanh.pop %v1799
      %v2010 = vtanh.pop %v1801
      %v2011 = vtanh.pop %v1897
      %2012 = vst [vmem:[%s336] sm:$0xff] %v1900
      %2013 = vst [vmem:[%s336 + $0x8] sm:$0xff] %v1901
      %2014 = vst [vmem:[%s336 + $0x10] sm:$0xff] %v1902
      %2015 = vst [vmem:[%s336 + $0x18] sm:$0xff] %v1903
      %2016 = vst [vmem:[%s336 + $0x20] sm:$0xff] %v1904
      %2017 = vst [vmem:[%s336 + $0x28] sm:$0xff] %v1905
      %2018 = vst [vmem:[%s336 + $0x30] sm:$0xff] %v1906
      %2019 = vst [vmem:[%s336 + $0x38] sm:$0xff] %v1907
      %2020 = vst [vmem:[%s336 + $0x40] sm:$0xff] %v1908
      %2021 = vst [vmem:[%s336 + $0x48] sm:$0xff] %v1909
      %2022 = vst [vmem:[%s336 + $0x50] sm:$0xff] %v1910
      %2023 = vst [vmem:[%s336 + $0x58] sm:$0xff] %v1911
      %2024 = vst [vmem:[%s336 + $0x60] sm:$0xff] %v1912
      %2025 = vst [vmem:[%s336 + $0x68] sm:$0xff] %v1913
      %2026 = vst [vmem:[%s336 + $0x70] sm:$0xff] %v1914
      %2027 = vst [vmem:[%s336 + $0x78] sm:$0xff] %v1915
      %2028 = vst [vmem:[%s336 + $0x80] sm:$0xff] %v1916
      %2029 = vst [vmem:[%s336 + $0x88] sm:$0xff] %v1917
      %2030 = vst [vmem:[%s336 + $0x90] sm:$0xff] %v1918
      %2031 = vst [vmem:[%s336 + $0x98] sm:$0xff] %v1919
      %2032 = vst [vmem:[%s336 + $0xa0] sm:$0xff] %v1920
      %2033 = vst [vmem:[%s336 + $0xa8] sm:$0xff] %v1921
      %2034 = vst [vmem:[%s336 + $0xb0] sm:$0xff] %v1922
      %2035 = vst [vmem:[%s336 + $0xb8] sm:$0xff] %v1923
      %2036 = vst [vmem:[%s336 + $0xc0] sm:$0xff] %v1924
      %2037 = vst [vmem:[%s336 + $0xc8] sm:$0xff] %v1925
      %2038 = vst [vmem:[%s336 + $0xd0] sm:$0xff] %v1926
      %2039 = vst [vmem:[%s336 + $0xd8] sm:$0xff] %v1927
      %2040 = vst [vmem:[%s336 + $0xe0] sm:$0xff] %v1928
      %2041 = vst [vmem:[%s336 + $0xe8] sm:$0xff] %v1929
      %2042 = vst [vmem:[%s336 + $0xf0] sm:$0xff] %v1930
      %2043 = vst [vmem:[%s336 + $0xf8] sm:$0xff] %v1931
      %2044 = vst [vmem:[%s336 + $0x100] sm:$0xff] %v1932
      %2045 = vst [vmem:[%s336 + $0x108] sm:$0xff] %v1933
      %2046 = vst [vmem:[%s336 + $0x110] sm:$0xff] %v1934
      %2047 = vst [vmem:[%s336 + $0x118] sm:$0xff] %v1935
      %2048 = vst [vmem:[%s336 + $0x120] sm:$0xff] %v1936
      %2049 = vst [vmem:[%s336 + $0x128] sm:$0xff] %v1937
      %2050 = vst [vmem:[%s336 + $0x130] sm:$0xff] %v1938
      %2051 = vst [vmem:[%s336 + $0x138] sm:$0xff] %v1939
      %2052 = vst [vmem:[%s336 + $0x140] sm:$0xff] %v1940
      %2053 = vst [vmem:[%s336 + $0x148] sm:$0xff] %v1941
      %2054 = vst [vmem:[%s336 + $0x150] sm:$0xff] %v1942
      %2055 = vst [vmem:[%s336 + $0x158] sm:$0xff] %v1943
      %2056 = vst [vmem:[%s336 + $0x160] sm:$0xff] %v1944
      %2057 = vst [vmem:[%s336 + $0x168] sm:$0xff] %v1945
      %2058 = vst [vmem:[%s336 + $0x170] sm:$0xff] %v1946
      %2059 = vst [vmem:[%s336 + $0x178] sm:$0xff] %v1947
      %2060 = vst [vmem:[%s336 + $0x180] sm:$0xff] %v1948
      %2061 = vst [vmem:[%s336 + $0x188] sm:$0xff] %v1949
      %2062 = vst [vmem:[%s336 + $0x190] sm:$0xff] %v1950
      %2063 = vst [vmem:[%s336 + $0x198] sm:$0xff] %v1951
      %2064 = vst [vmem:[%s336 + $0x1a0] sm:$0xff] %v1952
      %2065 = vst [vmem:[%s336 + $0x1a8] sm:$0xff] %v1953
      %2066 = vst [vmem:[%s336 + $0x1b0] sm:$0xff] %v1954
      %2067 = vst [vmem:[%s336 + $0x1b8] sm:$0xff] %v1955
      %2068 = vst [vmem:[%s336 + $0x1c0] sm:$0xff] %v1956
      %2069 = vst [vmem:[%s336 + $0x1c8] sm:$0xff] %v1957
      %2070 = vst [vmem:[%s336 + $0x1d0] sm:$0xff] %v1958
      %2071 = vst [vmem:[%s336 + $0x1d8] sm:$0xff] %v1959
      %2072 = vst [vmem:[%s336 + $0x1e0] sm:$0xff] %v1960
      %2073 = vst [vmem:[%s336 + $0x1e8] sm:$0xff] %v1961
      %2074 = vst [vmem:[%s336 + $0x1f0] sm:$0xff] %v1962
      %2075 = vst [vmem:[%s336 + $0x1f8] sm:$0xff] %v1963
      %2076 = vst [vmem:[%s336 + $0x200] sm:$0xff] %v1964
      %2077 = vst [vmem:[%s336 + $0x208] sm:$0xff] %v1965
      %2078 = vst [vmem:[%s336 + $0x210] sm:$0xff] %v1966
      %2079 = vst [vmem:[%s336 + $0x218] sm:$0xff] %v1967
      %2080 = vst [vmem:[%s336 + $0x220] sm:$0xff] %v1968
      %2081 = vst [vmem:[%s336 + $0x228] sm:$0xff] %v1969
      %2082 = vst [vmem:[%s336 + $0x230] sm:$0xff] %v1970
      %2083 = vst [vmem:[%s336 + $0x238] sm:$0xff] %v1971
      %2084 = vst [vmem:[%s336 + $0x240] sm:$0xff] %v1972
      %2085 = vst [vmem:[%s336 + $0x248] sm:$0xff] %v1973
      %2086 = vst [vmem:[%s336 + $0x250] sm:$0xff] %v1974
      %2087 = vst [vmem:[%s336 + $0x258] sm:$0xff] %v1975
      %2088 = vst [vmem:[%s336 + $0x260] sm:$0xff] %v1976
      %2089 = vst [vmem:[%s336 + $0x268] sm:$0xff] %v1977
      %2090 = vst [vmem:[%s336 + $0x270] sm:$0xff] %v1978
      %2091 = vst [vmem:[%s336 + $0x278] sm:$0xff] %v1979
      %2092 = vst [vmem:[%s336 + $0x280] sm:$0xff] %v1980
      %2093 = vst [vmem:[%s336 + $0x288] sm:$0xff] %v1981
      %2094 = vst [vmem:[%s336 + $0x290] sm:$0xff] %v1982
      %2095 = vst [vmem:[%s336 + $0x298] sm:$0xff] %v1983
      %2096 = vst [vmem:[%s336 + $0x2a0] sm:$0xff] %v1984
      %2097 = vst [vmem:[%s336 + $0x2a8] sm:$0xff] %v1985
      %2098 = vst [vmem:[%s336 + $0x2b0] sm:$0xff] %v1986
      %2099 = vst [vmem:[%s336 + $0x2b8] sm:$0xff] %v1987
      %2100 = vst [vmem:[%s336 + $0x2c0] sm:$0xff] %v1988
      %2101 = vst [vmem:[%s336 + $0x2c8] sm:$0xff] %v1989
      %2102 = vst [vmem:[%s336 + $0x2d0] sm:$0xff] %v1990
      %2103 = vst [vmem:[%s336 + $0x2d8] sm:$0xff] %v1991
      %2104 = vst [vmem:[%s336 + $0x2e0] sm:$0xff] %v1992
      %2105 = vst [vmem:[%s336 + $0x2e8] sm:$0xff] %v1993
      %2106 = vst [vmem:[%s336 + $0x2f0] sm:$0xff] %v1994
      %2107 = vst [vmem:[%s336 + $0x2f8] sm:$0xff] %v1995
      %2108 = vst [vmem:[%s336 + $0x300] sm:$0xff] %v1996
      %2109 = vst [vmem:[%s336 + $0x308] sm:$0xff] %v1997
      %2110 = vst [vmem:[%s336 + $0x310] sm:$0xff] %v1998
      %2111 = vst [vmem:[%s336 + $0x318] sm:$0xff] %v1999
      %2112 = vst [vmem:[%s336 + $0x320] sm:$0xff] %v2000
      %2113 = vst [vmem:[%s336 + $0x328] sm:$0xff] %v2001
      %2114 = vst [vmem:[%s336 + $0x330] sm:$0xff] %v2002
      %2115 = vst [vmem:[%s336 + $0x338] sm:$0xff] %v2003
      %2116 = vst [vmem:[%s336 + $0x340] sm:$0xff] %v2004
      %2117 = vst [vmem:[%s336 + $0x348] sm:$0xff] %v2005
      %2118 = vst [vmem:[%s336 + $0x350] sm:$0xff] %v2006
      %2119 = vst [vmem:[%s336 + $0x358] sm:$0xff] %v2007
      %2120 = vst [vmem:[%s336 + $0x360] sm:$0xff] %v2008
      %2121 = vst [vmem:[%s336 + $0x368] sm:$0xff] %v2009
      %2122 = vst [vmem:[%s336 + $0x370] sm:$0xff] %v2010
      %2123 = vst [vmem:[%s336 + $0x378] sm:$0xff] %v2011
      %s2124 = smul.u32 16, %s20
      %p2125 = scmp.lt.s32.totalorder %s2124, 31
      %s2126 = scalar_select %p2125, %s2124, 31
      %s2127 = smul.addr %s2126, 7
      %s2128 = smul.addr %s2127, 8
      %s2129 = scalar_lea.vmem %s9, %s2128
      // Predicated region
      $region57: #{generator_forward.1} parent=55 // pred_check
        %p2130 = pneg %p232
      $region58: #{generator_forward.1} parent=55 // pred_check_branch
        %2132 = sbr.rel (%p2130) target = $region60
      $region59: #{generator_forward.1} parent=55 // pred_region
        %s2133 = smul.u32 16, %s20
      $region60: #{generator_forward.1} parent=55 // pred_fallthru
        _
    $region56: #{generator_forward.1} parent=5 // pred_fallthru
      _
    %p2134 = scmp.le.s32.totalorder 2, %s15
    // Predicated region
    $region61: #{generator_forward.1} parent=5 // pred_check
      %p2135 = pneg %p2134
    $region62: #{generator_forward.1} parent=5 // pred_check_branch
      %2137 = sbr.rel (%p2135) target = $region64
    $region63: #{generator_forward.1} parent=5 // pred_region
      %s2138 = ssub.s32 %s15, 2
      // Predicated region
      $region65: #{generator_forward.1} parent=63 // pred_check
        %p2139 = pneg %p238
      $region66: #{generator_forward.1} parent=63 // pred_check_branch
        %2141 = sbr.rel (%p2139) target = $region68
      $region67: #{generator_forward.1} parent=63 // pred_region
        %s2142 = smul.u32 16, %s21
        %p2143 = scmp.lt.s32.totalorder %s2142, 31
        %s2144 = scalar_select %p2143, %s2142, 31
        %s2145 = smul.addr %s2144, 7
        %s2146 = smul.addr %s2145, 8
        %s2147 = scalar_lea.vmem %s9, %s2146
      $region68: #{generator_forward.1} parent=63 // pred_fallthru
        _
    $region64: #{generator_forward.1} parent=5 // pred_fallthru
      _
  $region6: #{generator_forward.1} parent=0 // loop_footer
    %s19 = sadd.s32 1, %s15
  $region7: #{generator_forward.1} parent=0 // loop_footer_branch
    %14 = sbr.rel target = $region3
  $region8: #{generator_forward.1} parent=0 // loop_exit
    _

</llo_original>
